<compile_context>
chip_gen: v5e
topology: v5e:2x2
jax: 0.10.0
libtpu: 0.0.40
codegen_flags: <defaults>
</compile_context>

<pallas_src>
import functools

import jax
import jax.numpy as jnp
import numpy as np
from jax.experimental import pallas as pl
from jax.experimental.pallas import tpu as pltpu


def _gate_update(gates, c, H):
    """LSTM cell update from packed (Bp, 4H) pre-activations, gate order i,f,g,o.

    One full-width sigmoid and one full-width tanh (whole 4H-lane slab) instead
    of four quarter-width transcendentals; the H=32 lane slices ride the XLU
    slot and are hidden under MXU/EUP latency.
    """
    sig = jax.nn.sigmoid(gates)
    th = jnp.tanh(gates)
    i = sig[:, 0 * H:1 * H]
    f = sig[:, 1 * H:2 * H]
    g = th[:, 2 * H:3 * H]
    o = sig[:, 3 * H:4 * H]
    c_new = f * c + i * g
    h_new = o * jnp.tanh(c_new)
    return h_new, c_new


def asr_kernel(xp0_ref,     # (S, Bp, 4H)  layer-0 input projection (+bias), time-major
               w_big_ref,   # (2H, 8H)     [[W_hh0^T, W_ih1^T], [0, W_hh1^T]]
               b1_ref,      # (1, 4H)      b_ih1 + b_hh1
               w_cls_ref,   # (S*H, Cpad)  classifier weight, lane-padded
               b_cls_ref,   # (1, Cpad)
               out_ref,     # (Bp, Cpad)
               *, S, H):
    Bp, Cpad = out_ref.shape

    # Fused recurrent weight: 16 vregs (moderate) — keep resident across steps.
    w_big = w_big_ref[...]
    # Hoisted bias broadcast (JAX does not CSE broadcast_in_dim inside loops).
    b1b = jnp.broadcast_to(b1_ref[...], (Bp, 4 * H))

    h1 = jnp.zeros((Bp, H), jnp.float32)
    c0 = jnp.zeros((Bp, H), jnp.float32)
    c1 = jnp.zeros((Bp, H), jnp.float32)
    # Layer-0 recurrent pre-activation h0_{t-1} @ W_hh0^T (zero for t=0).
    rec0 = jnp.zeros((Bp, 4 * H), jnp.float32)

    # Classifier accumulator (lane-dense Cpad columns), seeded with the bias.
    logits = jnp.broadcast_to(b_cls_ref[...], (Bp, Cpad)).astype(jnp.float32)

    # Unrolled recurrence (S is small & static).  Per step, the dependence
    # chain holds exactly one MXU push: [h0_t | h1_{t-1}] @ W_big, whose left
    # half feeds layer-0 at t+1 and right half feeds layer-1 at t.
    for t in range(S):
        # Layer 0 gates: free leading-dim read + previously computed recurrent term.
        g0 = xp0_ref[t] + rec0
        h0, c0 = _gate_update(g0, c0, H)

        # One fused block matmul for (layer-0 recurrent @ t+1) and (layer-1 gates @ t).
        inp = jnp.concatenate([h0, h1], axis=-1)                     # (Bp, 2H)
        pre = jnp.dot(inp, w_big, preferred_element_type=jnp.float32)  # (Bp, 8H)
        rec0 = pre[:, 0:4 * H]
        g1 = pre[:, 4 * H:8 * H] + b1b
        h1, c1 = _gate_update(g1, c1, H)

        # Classifier accumulated per step; the weight slice is loaded straight
        # from the Ref (8 vregs, dies immediately) and the matmul overlaps the
        # next step's recurrent push on the MXU.
        logits = logits + jnp.dot(
            h1, w_cls_ref[t * H:(t + 1) * H, :],
            preferred_element_type=jnp.float32)

    out_ref[...] = logits.astype(out_ref.dtype)


def asr_forward(x, params, *, num_hiddens, num_classes):
    """x: (B, S, F) float32.  Returns (B, S, num_classes)."""
    B, S, F = x.shape
    H = num_hiddens
    C = num_classes
    SC = S * C
    Cpad = ((SC + 127) // 128) * 128              # lane-dense output width
    Bp = ((max(B, 8) + 7) // 8) * 8               # sublane-aligned batch

    # ---- wrapper-side glue (plain XLA): layout / weight prep ----------------
    # Layer-0 input projection (off the recurrence critical path), time-major,
    # bias folded, batch padded to Bp with zero rows (discarded at the end).
    x_tm = jnp.transpose(x, (1, 0, 2))                                # (S, B, F)
    b0 = (params["b_ih0"] + params["b_hh0"]).reshape(1, 1, 4 * H)
    xp0 = jnp.einsum("sbf,gf->sbg", x_tm, params["w_ih0"]) + b0       # (S, B, 4H)
    xp0 = jnp.pad(xp0, ((0, 0), (0, Bp - B), (0, 0)))                 # (S, Bp, 4H)

    # Fused recurrent weight (2H, 8H): [[W_hh0^T, W_ih1^T], [0, W_hh1^T]].
    zeros_hw = jnp.zeros((H, 4 * H), jnp.float32)
    w_big = jnp.concatenate([
        jnp.concatenate([params["w_hh0"].T, params["w_ih1"].T], axis=1),
        jnp.concatenate([zeros_hw, params["w_hh1"].T], axis=1),
    ], axis=0)
    b1 = (params["b_ih1"] + params["b_hh1"]).reshape(1, 4 * H)

    w_cls_p = jnp.pad(params["w_cls"].T, ((0, 0), (0, Cpad - SC)))    # (S*H, Cpad)
    b_cls_p = jnp.pad(params["b_cls"], (0, Cpad - SC)).reshape(1, Cpad)

    vmem = pl.BlockSpec(memory_space=pltpu.MemorySpace.VMEM)
    out = pl.pallas_call(
        functools.partial(asr_kernel, S=S, H=H),
        out_shape=jax.ShapeDtypeStruct((Bp, Cpad), jnp.float32),
        in_specs=[vmem] * 5,
        out_specs=vmem,
    )(xp0, w_big, b1, w_cls_p, b_cls_p)

    return out[:B, :SC].reshape(B, S, C)


def _reference_forward(x, params, *, num_hiddens, num_classes):
    """Pure-JAX reference mirroring torch.nn.LSTM(num_layers=2) + Linear."""
    B, S, F = x.shape
    H = num_hiddens

    def run_layer(inp, w_ih, w_hh, b_ih, b_hh):
        h = jnp.zeros((B, H), jnp.float32)
        c = jnp.zeros((B, H), jnp.float32)
        outs = []
        for t in range(S):
            gates = inp[:, t, :] @ w_ih.T + h @ w_hh.T + b_ih + b_hh
            i = jax.nn.sigmoid(gates[:, 0 * H:1 * H])
            f = jax.nn.sigmoid(gates[:, 1 * H:2 * H])
            g = jnp.tanh(gates[:, 2 * H:3 * H])
            o = jax.nn.sigmoid(gates[:, 3 * H:4 * H])
            c = f * c + i * g
            h = o * jnp.tanh(c)
            outs.append(h)
        return jnp.stack(outs, axis=1)                 # (B, S, H)

    out0 = run_layer(x, params["w_ih0"], params["w_hh0"],
                     params["b_ih0"], params["b_hh0"])
    out1 = run_layer(out0, params["w_ih1"], params["w_hh1"],
                     params["b_ih1"], params["b_hh1"])
    flat = out1.reshape(B, S * H)
    cls = flat @ params["w_cls"].T + params["b_cls"]
    return cls.reshape(B, S, num_classes)


def init_params(key, *, seq_len, feature_dim, num_hiddens, num_classes):
    H = num_hiddens
    k = 1.0 / np.sqrt(H)
    ks = jax.random.split(key, 10)
    u = lambda kk, shape, bound: jax.random.uniform(
        kk, shape, jnp.float32, minval=-bound, maxval=bound)
    kc = 1.0 / np.sqrt(seq_len * H)
    return {
        "w_ih0": u(ks[0], (4 * H, feature_dim), k),
        "w_hh0": u(ks[1], (4 * H, H), k),
        "b_ih0": u(ks[2], (4 * H,), k),
        "b_hh0": u(ks[3], (4 * H,), k),
        "w_ih1": u(ks[4], (4 * H, H), k),
        "w_hh1": u(ks[5], (4 * H, H), k),
        "b_ih1": u(ks[6], (4 * H,), k),
        "b_hh1": u(ks[7], (4 * H,), k),
        "w_cls": u(ks[8], (seq_len * num_classes, seq_len * H), kc),
        "b_cls": u(ks[9], (seq_len * num_classes,), kc),
    }


if __name__ == "__main__":
    batch_size = 2
    seq_len = 8
    feature_dim = 10
    num_hiddens = 32
    num_classes = 27

    key = jax.random.PRNGKey(0)
    k_x, k_p = jax.random.split(key)
    x = jax.random.normal(k_x, (batch_size, seq_len, feature_dim), jnp.float32)
    params = init_params(k_p, seq_len=seq_len, feature_dim=feature_dim,
                         num_hiddens=num_hiddens, num_classes=num_classes)

    out = asr_forward(x, params, num_hiddens=num_hiddens,
                      num_classes=num_classes)
    out = jax.block_until_ready(out)
    assert out.shape == (batch_size, seq_len, num_classes)

    ref = _reference_forward(x, params, num_hiddens=num_hiddens,
                             num_classes=num_classes)
    np.testing.assert_allclose(np.asarray(out), np.asarray(ref),
                               rtol=1e-4, atol=1e-4)

    print("KERNEL_OK")
</pallas_src>

<mosaic_0001>
module attributes {stable_mosaic.version = 11 : i64} {
  func.func @asr_kernel(%arg0: memref<8x8x128xf32, #tpu.memory_space<vmem>>, %arg1: memref<64x256xf32, #tpu.memory_space<vmem>>, %arg2: memref<1x128xf32, #tpu.memory_space<vmem>>, %arg3: memref<256x256xf32, #tpu.memory_space<vmem>>, %arg4: memref<1x256xf32, #tpu.memory_space<vmem>>, %arg5: memref<8x256xf32, #tpu.memory_space<vmem>>) attributes {dimension_semantics = [], scalar_prefetch = 0 : i64, scratch_operands = 0 : i64, tpu.core_type = #tpu.core_type<tc>} {
    %c0 = arith.constant 0 : index
    %c0_0 = arith.constant 0 : index
    %0 = vector.load %arg1[%c0, %c0_0] : memref<64x256xf32, #tpu.memory_space<vmem>>, vector<64x256xf32>
    %c0_1 = arith.constant 0 : index
    %c0_2 = arith.constant 0 : index
    %1 = vector.load %arg2[%c0_1, %c0_2] : memref<1x128xf32, #tpu.memory_space<vmem>>, vector<1x128xf32>
    %2 = vector.shape_cast %1 : vector<1x128xf32> to vector<1x128xf32>
    %3 = vector.broadcast %2 : vector<1x128xf32> to vector<8x128xf32>
    %cst = arith.constant 0.000000e+00 : f32
    %4 = vector.broadcast %cst : f32 to vector<8x32xf32>
    %cst_3 = arith.constant 0.000000e+00 : f32
    %5 = vector.broadcast %cst_3 : f32 to vector<8x32xf32>
    %cst_4 = arith.constant 0.000000e+00 : f32
    %6 = vector.broadcast %cst_4 : f32 to vector<8x32xf32>
    %cst_5 = arith.constant 0.000000e+00 : f32
    %7 = vector.broadcast %cst_5 : f32 to vector<8x128xf32>
    %c0_6 = arith.constant 0 : index
    %c0_7 = arith.constant 0 : index
    %8 = vector.load %arg4[%c0_6, %c0_7] : memref<1x256xf32, #tpu.memory_space<vmem>>, vector<1x256xf32>
    %9 = vector.shape_cast %8 : vector<1x256xf32> to vector<1x256xf32>
    %10 = vector.broadcast %9 : vector<1x256xf32> to vector<8x256xf32>
    %c0_8 = arith.constant 0 : index
    %c0_9 = arith.constant 0 : index
    %c0_10 = arith.constant 0 : index
    %11 = vector.load %arg0[%c0_8, %c0_9, %c0_10] : memref<8x8x128xf32, #tpu.memory_space<vmem>>, vector<1x8x128xf32>
    %12 = vector.shape_cast %11 : vector<1x8x128xf32> to vector<8x128xf32>
    %13 = arith.addf %12, %7 : vector<8x128xf32>
    %14 = arith.negf %13 : vector<8x128xf32>
    %15 = math.exp %14 : vector<8x128xf32>
    %cst_11 = arith.constant 1.000000e+00 : f32
    %16 = vector.broadcast %cst_11 : f32 to vector<8x128xf32>
    %17 = arith.addf %16, %15 : vector<8x128xf32>
    %18 = arith.divf %16, %17 : vector<8x128xf32>
    %19 = math.tanh %13 : vector<8x128xf32>
    %20 = vector.extract_strided_slice %18 {offsets = [0, 0], sizes = [8, 32], strides = [1, 1]} : vector<8x128xf32> to vector<8x32xf32>
    %21 = vector.extract_strided_slice %18 {offsets = [0, 32], sizes = [8, 32], strides = [1, 1]} : vector<8x128xf32> to vector<8x32xf32>
    %22 = vector.extract_strided_slice %19 {offsets = [0, 64], sizes = [8, 32], strides = [1, 1]} : vector<8x128xf32> to vector<8x32xf32>
    %23 = vector.extract_strided_slice %18 {offsets = [0, 96], sizes = [8, 32], strides = [1, 1]} : vector<8x128xf32> to vector<8x32xf32>
    %24 = arith.mulf %21, %5 : vector<8x32xf32>
    %25 = arith.mulf %20, %22 : vector<8x32xf32>
    %26 = arith.addf %24, %25 : vector<8x32xf32>
    %27 = math.tanh %26 : vector<8x32xf32>
    %28 = arith.mulf %23, %27 : vector<8x32xf32>
    %29 = tpu.concatenate %28, %4 in 1 : vector<8x32xf32>, vector<8x32xf32> -> vector<8x64xf32>
    %cst_12 = arith.constant dense<0.000000e+00> : vector<8x256xf32>
    %30 = tpu.matmul %29, %0, %cst_12 {dimension_numbers = #tpu.dot_dimension_numbers<[1], [0], [0], [1], [0, 0, 1, 1], [], []>} : vector<8x64xf32>, vector<64x256xf32>, vector<8x256xf32> -> vector<8x256xf32>
    %31 = vector.extract_strided_slice %30 {offsets = [0, 0], sizes = [8, 128], strides = [1, 1]} : vector<8x256xf32> to vector<8x128xf32>
    %32 = vector.extract_strided_slice %30 {offsets = [0, 128], sizes = [8, 128], strides = [1, 1]} : vector<8x256xf32> to vector<8x128xf32>
    %33 = arith.addf %32, %3 : vector<8x128xf32>
    %34 = arith.negf %33 : vector<8x128xf32>
    %35 = math.exp %34 : vector<8x128xf32>
    %cst_13 = arith.constant 1.000000e+00 : f32
    %36 = vector.broadcast %cst_13 : f32 to vector<8x128xf32>
    %37 = arith.addf %36, %35 : vector<8x128xf32>
    %38 = arith.divf %36, %37 : vector<8x128xf32>
    %39 = math.tanh %33 : vector<8x128xf32>
    %40 = vector.extract_strided_slice %38 {offsets = [0, 0], sizes = [8, 32], strides = [1, 1]} : vector<8x128xf32> to vector<8x32xf32>
    %41 = vector.extract_strided_slice %38 {offsets = [0, 32], sizes = [8, 32], strides = [1, 1]} : vector<8x128xf32> to vector<8x32xf32>
    %42 = vector.extract_strided_slice %39 {offsets = [0, 64], sizes = [8, 32], strides = [1, 1]} : vector<8x128xf32> to vector<8x32xf32>
    %43 = vector.extract_strided_slice %38 {offsets = [0, 96], sizes = [8, 32], strides = [1, 1]} : vector<8x128xf32> to vector<8x32xf32>
    %44 = arith.mulf %41, %6 : vector<8x32xf32>
    %45 = arith.mulf %40, %42 : vector<8x32xf32>
    %46 = arith.addf %44, %45 : vector<8x32xf32>
    %47 = math.tanh %46 : vector<8x32xf32>
    %48 = arith.mulf %43, %47 : vector<8x32xf32>
    %c0_14 = arith.constant 0 : index
    %c0_15 = arith.constant 0 : index
    %49 = vector.load %arg3[%c0_14, %c0_15] : memref<256x256xf32, #tpu.memory_space<vmem>>, vector<32x256xf32>
    %cst_16 = arith.constant dense<0.000000e+00> : vector<8x256xf32>
    %50 = tpu.matmul %48, %49, %cst_16 {dimension_numbers = #tpu.dot_dimension_numbers<[1], [0], [0], [1], [0, 0, 1, 1], [], []>} : vector<8x32xf32>, vector<32x256xf32>, vector<8x256xf32> -> vector<8x256xf32>
    %51 = arith.addf %10, %50 : vector<8x256xf32>
    %c1 = arith.constant 1 : index
    %c0_17 = arith.constant 0 : index
    %c0_18 = arith.constant 0 : index
    %52 = vector.load %arg0[%c1, %c0_17, %c0_18] : memref<8x8x128xf32, #tpu.memory_space<vmem>>, vector<1x8x128xf32>
    %53 = vector.shape_cast %52 : vector<1x8x128xf32> to vector<8x128xf32>
    %54 = arith.addf %53, %31 : vector<8x128xf32>
    %55 = arith.negf %54 : vector<8x128xf32>
    %56 = math.exp %55 : vector<8x128xf32>
    %cst_19 = arith.constant 1.000000e+00 : f32
    %57 = vector.broadcast %cst_19 : f32 to vector<8x128xf32>
    %58 = arith.addf %57, %56 : vector<8x128xf32>
    %59 = arith.divf %57, %58 : vector<8x128xf32>
    %60 = math.tanh %54 : vector<8x128xf32>
    %61 = vector.extract_strided_slice %59 {offsets = [0, 0], sizes = [8, 32], strides = [1, 1]} : vector<8x128xf32> to vector<8x32xf32>
    %62 = vector.extract_strided_slice %59 {offsets = [0, 32], sizes = [8, 32], strides = [1, 1]} : vector<8x128xf32> to vector<8x32xf32>
    %63 = vector.extract_strided_slice %60 {offsets = [0, 64], sizes = [8, 32], strides = [1, 1]} : vector<8x128xf32> to vector<8x32xf32>
    %64 = vector.extract_strided_slice %59 {offsets = [0, 96], sizes = [8, 32], strides = [1, 1]} : vector<8x128xf32> to vector<8x32xf32>
    %65 = arith.mulf %62, %26 : vector<8x32xf32>
    %66 = arith.mulf %61, %63 : vector<8x32xf32>
    %67 = arith.addf %65, %66 : vector<8x32xf32>
    %68 = math.tanh %67 : vector<8x32xf32>
    %69 = arith.mulf %64, %68 : vector<8x32xf32>
    %70 = tpu.concatenate %69, %48 in 1 : vector<8x32xf32>, vector<8x32xf32> -> vector<8x64xf32>
    %cst_20 = arith.constant dense<0.000000e+00> : vector<8x256xf32>
    %71 = tpu.matmul %70, %0, %cst_20 {dimension_numbers = #tpu.dot_dimension_numbers<[1], [0], [0], [1], [0, 0, 1, 1], [], []>} : vector<8x64xf32>, vector<64x256xf32>, vector<8x256xf32> -> vector<8x256xf32>
    %72 = vector.extract_strided_slice %71 {offsets = [0, 0], sizes = [8, 128], strides = [1, 1]} : vector<8x256xf32> to vector<8x128xf32>
    %73 = vector.extract_strided_slice %71 {offsets = [0, 128], sizes = [8, 128], strides = [1, 1]} : vector<8x256xf32> to vector<8x128xf32>
    %74 = arith.addf %73, %3 : vector<8x128xf32>
    %75 = arith.negf %74 : vector<8x128xf32>
    %76 = math.exp %75 : vector<8x128xf32>
    %cst_21 = arith.constant 1.000000e+00 : f32
    %77 = vector.broadcast %cst_21 : f32 to vector<8x128xf32>
    %78 = arith.addf %77, %76 : vector<8x128xf32>
    %79 = arith.divf %77, %78 : vector<8x128xf32>
    %80 = math.tanh %74 : vector<8x128xf32>
    %81 = vector.extract_strided_slice %79 {offsets = [0, 0], sizes = [8, 32], strides = [1, 1]} : vector<8x128xf32> to vector<8x32xf32>
    %82 = vector.extract_strided_slice %79 {offsets = [0, 32], sizes = [8, 32], strides = [1, 1]} : vector<8x128xf32> to vector<8x32xf32>
    %83 = vector.extract_strided_slice %80 {offsets = [0, 64], sizes = [8, 32], strides = [1, 1]} : vector<8x128xf32> to vector<8x32xf32>
    %84 = vector.extract_strided_slice %79 {offsets = [0, 96], sizes = [8, 32], strides = [1, 1]} : vector<8x128xf32> to vector<8x32xf32>
    %85 = arith.mulf %82, %46 : vector<8x32xf32>
    %86 = arith.mulf %81, %83 : vector<8x32xf32>
    %87 = arith.addf %85, %86 : vector<8x32xf32>
    %88 = math.tanh %87 : vector<8x32xf32>
    %89 = arith.mulf %84, %88 : vector<8x32xf32>
    %c32 = arith.constant 32 : index
    %c0_22 = arith.constant 0 : index
    %90 = vector.load %arg3[%c32, %c0_22] : memref<256x256xf32, #tpu.memory_space<vmem>>, vector<32x256xf32>
    %cst_23 = arith.constant dense<0.000000e+00> : vector<8x256xf32>
    %91 = tpu.matmul %89, %90, %cst_23 {dimension_numbers = #tpu.dot_dimension_numbers<[1], [0], [0], [1], [0, 0, 1, 1], [], []>} : vector<8x32xf32>, vector<32x256xf32>, vector<8x256xf32> -> vector<8x256xf32>
    %92 = arith.addf %51, %91 : vector<8x256xf32>
    %c2 = arith.constant 2 : index
    %c0_24 = arith.constant 0 : index
    %c0_25 = arith.constant 0 : index
    %93 = vector.load %arg0[%c2, %c0_24, %c0_25] : memref<8x8x128xf32, #tpu.memory_space<vmem>>, vector<1x8x128xf32>
    %94 = vector.shape_cast %93 : vector<1x8x128xf32> to vector<8x128xf32>
    %95 = arith.addf %94, %72 : vector<8x128xf32>
    %96 = arith.negf %95 : vector<8x128xf32>
    %97 = math.exp %96 : vector<8x128xf32>
    %cst_26 = arith.constant 1.000000e+00 : f32
    %98 = vector.broadcast %cst_26 : f32 to vector<8x128xf32>
    %99 = arith.addf %98, %97 : vector<8x128xf32>
    %100 = arith.divf %98, %99 : vector<8x128xf32>
    %101 = math.tanh %95 : vector<8x128xf32>
    %102 = vector.extract_strided_slice %100 {offsets = [0, 0], sizes = [8, 32], strides = [1, 1]} : vector<8x128xf32> to vector<8x32xf32>
    %103 = vector.extract_strided_slice %100 {offsets = [0, 32], sizes = [8, 32], strides = [1, 1]} : vector<8x128xf32> to vector<8x32xf32>
    %104 = vector.extract_strided_slice %101 {offsets = [0, 64], sizes = [8, 32], strides = [1, 1]} : vector<8x128xf32> to vector<8x32xf32>
    %105 = vector.extract_strided_slice %100 {offsets = [0, 96], sizes = [8, 32], strides = [1, 1]} : vector<8x128xf32> to vector<8x32xf32>
    %106 = arith.mulf %103, %67 : vector<8x32xf32>
    %107 = arith.mulf %102, %104 : vector<8x32xf32>
    %108 = arith.addf %106, %107 : vector<8x32xf32>
    %109 = math.tanh %108 : vector<8x32xf32>
    %110 = arith.mulf %105, %109 : vector<8x32xf32>
    %111 = tpu.concatenate %110, %89 in 1 : vector<8x32xf32>, vector<8x32xf32> -> vector<8x64xf32>
    %cst_27 = arith.constant dense<0.000000e+00> : vector<8x256xf32>
    %112 = tpu.matmul %111, %0, %cst_27 {dimension_numbers = #tpu.dot_dimension_numbers<[1], [0], [0], [1], [0, 0, 1, 1], [], []>} : vector<8x64xf32>, vector<64x256xf32>, vector<8x256xf32> -> vector<8x256xf32>
    %113 = vector.extract_strided_slice %112 {offsets = [0, 0], sizes = [8, 128], strides = [1, 1]} : vector<8x256xf32> to vector<8x128xf32>
    %114 = vector.extract_strided_slice %112 {offsets = [0, 128], sizes = [8, 128], strides = [1, 1]} : vector<8x256xf32> to vector<8x128xf32>
    %115 = arith.addf %114, %3 : vector<8x128xf32>
    %116 = arith.negf %115 : vector<8x128xf32>
    %117 = math.exp %116 : vector<8x128xf32>
    %cst_28 = arith.constant 1.000000e+00 : f32
    %118 = vector.broadcast %cst_28 : f32 to vector<8x128xf32>
    %119 = arith.addf %118, %117 : vector<8x128xf32>
    %120 = arith.divf %118, %119 : vector<8x128xf32>
    %121 = math.tanh %115 : vector<8x128xf32>
    %122 = vector.extract_strided_slice %120 {offsets = [0, 0], sizes = [8, 32], strides = [1, 1]} : vector<8x128xf32> to vector<8x32xf32>
    %123 = vector.extract_strided_slice %120 {offsets = [0, 32], sizes = [8, 32], strides = [1, 1]} : vector<8x128xf32> to vector<8x32xf32>
    %124 = vector.extract_strided_slice %121 {offsets = [0, 64], sizes = [8, 32], strides = [1, 1]} : vector<8x128xf32> to vector<8x32xf32>
    %125 = vector.extract_strided_slice %120 {offsets = [0, 96], sizes = [8, 32], strides = [1, 1]} : vector<8x128xf32> to vector<8x32xf32>
    %126 = arith.mulf %123, %87 : vector<8x32xf32>
    %127 = arith.mulf %122, %124 : vector<8x32xf32>
    %128 = arith.addf %126, %127 : vector<8x32xf32>
    %129 = math.tanh %128 : vector<8x32xf32>
    %130 = arith.mulf %125, %129 : vector<8x32xf32>
    %c64 = arith.constant 64 : index
    %c0_29 = arith.constant 0 : index
    %131 = vector.load %arg3[%c64, %c0_29] : memref<256x256xf32, #tpu.memory_space<vmem>>, vector<32x256xf32>
    %cst_30 = arith.constant dense<0.000000e+00> : vector<8x256xf32>
    %132 = tpu.matmul %130, %131, %cst_30 {dimension_numbers = #tpu.dot_dimension_numbers<[1], [0], [0], [1], [0, 0, 1, 1], [], []>} : vector<8x32xf32>, vector<32x256xf32>, vector<8x256xf32> -> vector<8x256xf32>
    %133 = arith.addf %92, %132 : vector<8x256xf32>
    %c3 = arith.constant 3 : index
    %c0_31 = arith.constant 0 : index
    %c0_32 = arith.constant 0 : index
    %134 = vector.load %arg0[%c3, %c0_31, %c0_32] : memref<8x8x128xf32, #tpu.memory_space<vmem>>, vector<1x8x128xf32>
    %135 = vector.shape_cast %134 : vector<1x8x128xf32> to vector<8x128xf32>
    %136 = arith.addf %135, %113 : vector<8x128xf32>
    %137 = arith.negf %136 : vector<8x128xf32>
    %138 = math.exp %137 : vector<8x128xf32>
    %cst_33 = arith.constant 1.000000e+00 : f32
    %139 = vector.broadcast %cst_33 : f32 to vector<8x128xf32>
    %140 = arith.addf %139, %138 : vector<8x128xf32>
    %141 = arith.divf %139, %140 : vector<8x128xf32>
    %142 = math.tanh %136 : vector<8x128xf32>
    %143 = vector.extract_strided_slice %141 {offsets = [0, 0], sizes = [8, 32], strides = [1, 1]} : vector<8x128xf32> to vector<8x32xf32>
    %144 = vector.extract_strided_slice %141 {offsets = [0, 32], sizes = [8, 32], strides = [1, 1]} : vector<8x128xf32> to vector<8x32xf32>
    %145 = vector.extract_strided_slice %142 {offsets = [0, 64], sizes = [8, 32], strides = [1, 1]} : vector<8x128xf32> to vector<8x32xf32>
    %146 = vector.extract_strided_slice %141 {offsets = [0, 96], sizes = [8, 32], strides = [1, 1]} : vector<8x128xf32> to vector<8x32xf32>
    %147 = arith.mulf %144, %108 : vector<8x32xf32>
    %148 = arith.mulf %143, %145 : vector<8x32xf32>
    %149 = arith.addf %147, %148 : vector<8x32xf32>
    %150 = math.tanh %149 : vector<8x32xf32>
    %151 = arith.mulf %146, %150 : vector<8x32xf32>
    %152 = tpu.concatenate %151, %130 in 1 : vector<8x32xf32>, vector<8x32xf32> -> vector<8x64xf32>
    %cst_34 = arith.constant dense<0.000000e+00> : vector<8x256xf32>
    %153 = tpu.matmul %152, %0, %cst_34 {dimension_numbers = #tpu.dot_dimension_numbers<[1], [0], [0], [1], [0, 0, 1, 1], [], []>} : vector<8x64xf32>, vector<64x256xf32>, vector<8x256xf32> -> vector<8x256xf32>
    %154 = vector.extract_strided_slice %153 {offsets = [0, 0], sizes = [8, 128], strides = [1, 1]} : vector<8x256xf32> to vector<8x128xf32>
    %155 = vector.extract_strided_slice %153 {offsets = [0, 128], sizes = [8, 128], strides = [1, 1]} : vector<8x256xf32> to vector<8x128xf32>
    %156 = arith.addf %155, %3 : vector<8x128xf32>
    %157 = arith.negf %156 : vector<8x128xf32>
    %158 = math.exp %157 : vector<8x128xf32>
    %cst_35 = arith.constant 1.000000e+00 : f32
    %159 = vector.broadcast %cst_35 : f32 to vector<8x128xf32>
    %160 = arith.addf %159, %158 : vector<8x128xf32>
    %161 = arith.divf %159, %160 : vector<8x128xf32>
    %162 = math.tanh %156 : vector<8x128xf32>
    %163 = vector.extract_strided_slice %161 {offsets = [0, 0], sizes = [8, 32], strides = [1, 1]} : vector<8x128xf32> to vector<8x32xf32>
    %164 = vector.extract_strided_slice %161 {offsets = [0, 32], sizes = [8, 32], strides = [1, 1]} : vector<8x128xf32> to vector<8x32xf32>
    %165 = vector.extract_strided_slice %162 {offsets = [0, 64], sizes = [8, 32], strides = [1, 1]} : vector<8x128xf32> to vector<8x32xf32>
    %166 = vector.extract_strided_slice %161 {offsets = [0, 96], sizes = [8, 32], strides = [1, 1]} : vector<8x128xf32> to vector<8x32xf32>
    %167 = arith.mulf %164, %128 : vector<8x32xf32>
    %168 = arith.mulf %163, %165 : vector<8x32xf32>
    %169 = arith.addf %167, %168 : vector<8x32xf32>
    %170 = math.tanh %169 : vector<8x32xf32>
    %171 = arith.mulf %166, %170 : vector<8x32xf32>
    %c96 = arith.constant 96 : index
    %c0_36 = arith.constant 0 : index
    %172 = vector.load %arg3[%c96, %c0_36] : memref<256x256xf32, #tpu.memory_space<vmem>>, vector<32x256xf32>
    %cst_37 = arith.constant dense<0.000000e+00> : vector<8x256xf32>
    %173 = tpu.matmul %171, %172, %cst_37 {dimension_numbers = #tpu.dot_dimension_numbers<[1], [0], [0], [1], [0, 0, 1, 1], [], []>} : vector<8x32xf32>, vector<32x256xf32>, vector<8x256xf32> -> vector<8x256xf32>
    %174 = arith.addf %133, %173 : vector<8x256xf32>
    %c4 = arith.constant 4 : index
    %c0_38 = arith.constant 0 : index
    %c0_39 = arith.constant 0 : index
    %175 = vector.load %arg0[%c4, %c0_38, %c0_39] : memref<8x8x128xf32, #tpu.memory_space<vmem>>, vector<1x8x128xf32>
    %176 = vector.shape_cast %175 : vector<1x8x128xf32> to vector<8x128xf32>
    %177 = arith.addf %176, %154 : vector<8x128xf32>
    %178 = arith.negf %177 : vector<8x128xf32>
    %179 = math.exp %178 : vector<8x128xf32>
    %cst_40 = arith.constant 1.000000e+00 : f32
    %180 = vector.broadcast %cst_40 : f32 to vector<8x128xf32>
    %181 = arith.addf %180, %179 : vector<8x128xf32>
    %182 = arith.divf %180, %181 : vector<8x128xf32>
    %183 = math.tanh %177 : vector<8x128xf32>
    %184 = vector.extract_strided_slice %182 {offsets = [0, 0], sizes = [8, 32], strides = [1, 1]} : vector<8x128xf32> to vector<8x32xf32>
    %185 = vector.extract_strided_slice %182 {offsets = [0, 32], sizes = [8, 32], strides = [1, 1]} : vector<8x128xf32> to vector<8x32xf32>
    %186 = vector.extract_strided_slice %183 {offsets = [0, 64], sizes = [8, 32], strides = [1, 1]} : vector<8x128xf32> to vector<8x32xf32>
    %187 = vector.extract_strided_slice %182 {offsets = [0, 96], sizes = [8, 32], strides = [1, 1]} : vector<8x128xf32> to vector<8x32xf32>
    %188 = arith.mulf %185, %149 : vector<8x32xf32>
    %189 = arith.mulf %184, %186 : vector<8x32xf32>
    %190 = arith.addf %188, %189 : vector<8x32xf32>
    %191 = math.tanh %190 : vector<8x32xf32>
    %192 = arith.mulf %187, %191 : vector<8x32xf32>
    %193 = tpu.concatenate %192, %171 in 1 : vector<8x32xf32>, vector<8x32xf32> -> vector<8x64xf32>
    %cst_41 = arith.constant dense<0.000000e+00> : vector<8x256xf32>
    %194 = tpu.matmul %193, %0, %cst_41 {dimension_numbers = #tpu.dot_dimension_numbers<[1], [0], [0], [1], [0, 0, 1, 1], [], []>} : vector<8x64xf32>, vector<64x256xf32>, vector<8x256xf32> -> vector<8x256xf32>
    %195 = vector.extract_strided_slice %194 {offsets = [0, 0], sizes = [8, 128], strides = [1, 1]} : vector<8x256xf32> to vector<8x128xf32>
    %196 = vector.extract_strided_slice %194 {offsets = [0, 128], sizes = [8, 128], strides = [1, 1]} : vector<8x256xf32> to vector<8x128xf32>
    %197 = arith.addf %196, %3 : vector<8x128xf32>
    %198 = arith.negf %197 : vector<8x128xf32>
    %199 = math.exp %198 : vector<8x128xf32>
    %cst_42 = arith.constant 1.000000e+00 : f32
    %200 = vector.broadcast %cst_42 : f32 to vector<8x128xf32>
    %201 = arith.addf %200, %199 : vector<8x128xf32>
    %202 = arith.divf %200, %201 : vector<8x128xf32>
    %203 = math.tanh %197 : vector<8x128xf32>
    %204 = vector.extract_strided_slice %202 {offsets = [0, 0], sizes = [8, 32], strides = [1, 1]} : vector<8x128xf32> to vector<8x32xf32>
    %205 = vector.extract_strided_slice %202 {offsets = [0, 32], sizes = [8, 32], strides = [1, 1]} : vector<8x128xf32> to vector<8x32xf32>
    %206 = vector.extract_strided_slice %203 {offsets = [0, 64], sizes = [8, 32], strides = [1, 1]} : vector<8x128xf32> to vector<8x32xf32>
    %207 = vector.extract_strided_slice %202 {offsets = [0, 96], sizes = [8, 32], strides = [1, 1]} : vector<8x128xf32> to vector<8x32xf32>
    %208 = arith.mulf %205, %169 : vector<8x32xf32>
    %209 = arith.mulf %204, %206 : vector<8x32xf32>
    %210 = arith.addf %208, %209 : vector<8x32xf32>
    %211 = math.tanh %210 : vector<8x32xf32>
    %212 = arith.mulf %207, %211 : vector<8x32xf32>
    %c128 = arith.constant 128 : index
    %c0_43 = arith.constant 0 : index
    %213 = vector.load %arg3[%c128, %c0_43] : memref<256x256xf32, #tpu.memory_space<vmem>>, vector<32x256xf32>
    %cst_44 = arith.constant dense<0.000000e+00> : vector<8x256xf32>
    %214 = tpu.matmul %212, %213, %cst_44 {dimension_numbers = #tpu.dot_dimension_numbers<[1], [0], [0], [1], [0, 0, 1, 1], [], []>} : vector<8x32xf32>, vector<32x256xf32>, vector<8x256xf32> -> vector<8x256xf32>
    %215 = arith.addf %174, %214 : vector<8x256xf32>
    %c5 = arith.constant 5 : index
    %c0_45 = arith.constant 0 : index
    %c0_46 = arith.constant 0 : index
    %216 = vector.load %arg0[%c5, %c0_45, %c0_46] : memref<8x8x128xf32, #tpu.memory_space<vmem>>, vector<1x8x128xf32>
    %217 = vector.shape_cast %216 : vector<1x8x128xf32> to vector<8x128xf32>
    %218 = arith.addf %217, %195 : vector<8x128xf32>
    %219 = arith.negf %218 : vector<8x128xf32>
    %220 = math.exp %219 : vector<8x128xf32>
    %cst_47 = arith.constant 1.000000e+00 : f32
    %221 = vector.broadcast %cst_47 : f32 to vector<8x128xf32>
    %222 = arith.addf %221, %220 : vector<8x128xf32>
    %223 = arith.divf %221, %222 : vector<8x128xf32>
    %224 = math.tanh %218 : vector<8x128xf32>
    %225 = vector.extract_strided_slice %223 {offsets = [0, 0], sizes = [8, 32], strides = [1, 1]} : vector<8x128xf32> to vector<8x32xf32>
    %226 = vector.extract_strided_slice %223 {offsets = [0, 32], sizes = [8, 32], strides = [1, 1]} : vector<8x128xf32> to vector<8x32xf32>
    %227 = vector.extract_strided_slice %224 {offsets = [0, 64], sizes = [8, 32], strides = [1, 1]} : vector<8x128xf32> to vector<8x32xf32>
    %228 = vector.extract_strided_slice %223 {offsets = [0, 96], sizes = [8, 32], strides = [1, 1]} : vector<8x128xf32> to vector<8x32xf32>
    %229 = arith.mulf %226, %190 : vector<8x32xf32>
    %230 = arith.mulf %225, %227 : vector<8x32xf32>
    %231 = arith.addf %229, %230 : vector<8x32xf32>
    %232 = math.tanh %231 : vector<8x32xf32>
    %233 = arith.mulf %228, %232 : vector<8x32xf32>
    %234 = tpu.concatenate %233, %212 in 1 : vector<8x32xf32>, vector<8x32xf32> -> vector<8x64xf32>
    %cst_48 = arith.constant dense<0.000000e+00> : vector<8x256xf32>
    %235 = tpu.matmul %234, %0, %cst_48 {dimension_numbers = #tpu.dot_dimension_numbers<[1], [0], [0], [1], [0, 0, 1, 1], [], []>} : vector<8x64xf32>, vector<64x256xf32>, vector<8x256xf32> -> vector<8x256xf32>
    %236 = vector.extract_strided_slice %235 {offsets = [0, 0], sizes = [8, 128], strides = [1, 1]} : vector<8x256xf32> to vector<8x128xf32>
    %237 = vector.extract_strided_slice %235 {offsets = [0, 128], sizes = [8, 128], strides = [1, 1]} : vector<8x256xf32> to vector<8x128xf32>
    %238 = arith.addf %237, %3 : vector<8x128xf32>
    %239 = arith.negf %238 : vector<8x128xf32>
    %240 = math.exp %239 : vector<8x128xf32>
    %cst_49 = arith.constant 1.000000e+00 : f32
    %241 = vector.broadcast %cst_49 : f32 to vector<8x128xf32>
    %242 = arith.addf %241, %240 : vector<8x128xf32>
    %243 = arith.divf %241, %242 : vector<8x128xf32>
    %244 = math.tanh %238 : vector<8x128xf32>
    %245 = vector.extract_strided_slice %243 {offsets = [0, 0], sizes = [8, 32], strides = [1, 1]} : vector<8x128xf32> to vector<8x32xf32>
    %246 = vector.extract_strided_slice %243 {offsets = [0, 32], sizes = [8, 32], strides = [1, 1]} : vector<8x128xf32> to vector<8x32xf32>
    %247 = vector.extract_strided_slice %244 {offsets = [0, 64], sizes = [8, 32], strides = [1, 1]} : vector<8x128xf32> to vector<8x32xf32>
    %248 = vector.extract_strided_slice %243 {offsets = [0, 96], sizes = [8, 32], strides = [1, 1]} : vector<8x128xf32> to vector<8x32xf32>
    %249 = arith.mulf %246, %210 : vector<8x32xf32>
    %250 = arith.mulf %245, %247 : vector<8x32xf32>
    %251 = arith.addf %249, %250 : vector<8x32xf32>
    %252 = math.tanh %251 : vector<8x32xf32>
    %253 = arith.mulf %248, %252 : vector<8x32xf32>
    %c160 = arith.constant 160 : index
    %c0_50 = arith.constant 0 : index
    %254 = vector.load %arg3[%c160, %c0_50] : memref<256x256xf32, #tpu.memory_space<vmem>>, vector<32x256xf32>
    %cst_51 = arith.constant dense<0.000000e+00> : vector<8x256xf32>
    %255 = tpu.matmul %253, %254, %cst_51 {dimension_numbers = #tpu.dot_dimension_numbers<[1], [0], [0], [1], [0, 0, 1, 1], [], []>} : vector<8x32xf32>, vector<32x256xf32>, vector<8x256xf32> -> vector<8x256xf32>
    %256 = arith.addf %215, %255 : vector<8x256xf32>
    %c6 = arith.constant 6 : index
    %c0_52 = arith.constant 0 : index
    %c0_53 = arith.constant 0 : index
    %257 = vector.load %arg0[%c6, %c0_52, %c0_53] : memref<8x8x128xf32, #tpu.memory_space<vmem>>, vector<1x8x128xf32>
    %258 = vector.shape_cast %257 : vector<1x8x128xf32> to vector<8x128xf32>
    %259 = arith.addf %258, %236 : vector<8x128xf32>
    %260 = arith.negf %259 : vector<8x128xf32>
    %261 = math.exp %260 : vector<8x128xf32>
    %cst_54 = arith.constant 1.000000e+00 : f32
    %262 = vector.broadcast %cst_54 : f32 to vector<8x128xf32>
    %263 = arith.addf %262, %261 : vector<8x128xf32>
    %264 = arith.divf %262, %263 : vector<8x128xf32>
    %265 = math.tanh %259 : vector<8x128xf32>
    %266 = vector.extract_strided_slice %264 {offsets = [0, 0], sizes = [8, 32], strides = [1, 1]} : vector<8x128xf32> to vector<8x32xf32>
    %267 = vector.extract_strided_slice %264 {offsets = [0, 32], sizes = [8, 32], strides = [1, 1]} : vector<8x128xf32> to vector<8x32xf32>
    %268 = vector.extract_strided_slice %265 {offsets = [0, 64], sizes = [8, 32], strides = [1, 1]} : vector<8x128xf32> to vector<8x32xf32>
    %269 = vector.extract_strided_slice %264 {offsets = [0, 96], sizes = [8, 32], strides = [1, 1]} : vector<8x128xf32> to vector<8x32xf32>
    %270 = arith.mulf %267, %231 : vector<8x32xf32>
    %271 = arith.mulf %266, %268 : vector<8x32xf32>
    %272 = arith.addf %270, %271 : vector<8x32xf32>
    %273 = math.tanh %272 : vector<8x32xf32>
    %274 = arith.mulf %269, %273 : vector<8x32xf32>
    %275 = tpu.concatenate %274, %253 in 1 : vector<8x32xf32>, vector<8x32xf32> -> vector<8x64xf32>
    %cst_55 = arith.constant dense<0.000000e+00> : vector<8x256xf32>
    %276 = tpu.matmul %275, %0, %cst_55 {dimension_numbers = #tpu.dot_dimension_numbers<[1], [0], [0], [1], [0, 0, 1, 1], [], []>} : vector<8x64xf32>, vector<64x256xf32>, vector<8x256xf32> -> vector<8x256xf32>
    %277 = vector.extract_strided_slice %276 {offsets = [0, 0], sizes = [8, 128], strides = [1, 1]} : vector<8x256xf32> to vector<8x128xf32>
    %278 = vector.extract_strided_slice %276 {offsets = [0, 128], sizes = [8, 128], strides = [1, 1]} : vector<8x256xf32> to vector<8x128xf32>
    %279 = arith.addf %278, %3 : vector<8x128xf32>
    %280 = arith.negf %279 : vector<8x128xf32>
    %281 = math.exp %280 : vector<8x128xf32>
    %cst_56 = arith.constant 1.000000e+00 : f32
    %282 = vector.broadcast %cst_56 : f32 to vector<8x128xf32>
    %283 = arith.addf %282, %281 : vector<8x128xf32>
    %284 = arith.divf %282, %283 : vector<8x128xf32>
    %285 = math.tanh %279 : vector<8x128xf32>
    %286 = vector.extract_strided_slice %284 {offsets = [0, 0], sizes = [8, 32], strides = [1, 1]} : vector<8x128xf32> to vector<8x32xf32>
    %287 = vector.extract_strided_slice %284 {offsets = [0, 32], sizes = [8, 32], strides = [1, 1]} : vector<8x128xf32> to vector<8x32xf32>
    %288 = vector.extract_strided_slice %285 {offsets = [0, 64], sizes = [8, 32], strides = [1, 1]} : vector<8x128xf32> to vector<8x32xf32>
    %289 = vector.extract_strided_slice %284 {offsets = [0, 96], sizes = [8, 32], strides = [1, 1]} : vector<8x128xf32> to vector<8x32xf32>
    %290 = arith.mulf %287, %251 : vector<8x32xf32>
    %291 = arith.mulf %286, %288 : vector<8x32xf32>
    %292 = arith.addf %290, %291 : vector<8x32xf32>
    %293 = math.tanh %292 : vector<8x32xf32>
    %294 = arith.mulf %289, %293 : vector<8x32xf32>
    %c192 = arith.constant 192 : index
    %c0_57 = arith.constant 0 : index
    %295 = vector.load %arg3[%c192, %c0_57] : memref<256x256xf32, #tpu.memory_space<vmem>>, vector<32x256xf32>
    %cst_58 = arith.constant dense<0.000000e+00> : vector<8x256xf32>
    %296 = tpu.matmul %294, %295, %cst_58 {dimension_numbers = #tpu.dot_dimension_numbers<[1], [0], [0], [1], [0, 0, 1, 1], [], []>} : vector<8x32xf32>, vector<32x256xf32>, vector<8x256xf32> -> vector<8x256xf32>
    %297 = arith.addf %256, %296 : vector<8x256xf32>
    %c7 = arith.constant 7 : index
    %c0_59 = arith.constant 0 : index
    %c0_60 = arith.constant 0 : index
    %298 = vector.load %arg0[%c7, %c0_59, %c0_60] : memref<8x8x128xf32, #tpu.memory_space<vmem>>, vector<1x8x128xf32>
    %299 = vector.shape_cast %298 : vector<1x8x128xf32> to vector<8x128xf32>
    %300 = arith.addf %299, %277 : vector<8x128xf32>
    %301 = arith.negf %300 : vector<8x128xf32>
    %302 = math.exp %301 : vector<8x128xf32>
    %cst_61 = arith.constant 1.000000e+00 : f32
    %303 = vector.broadcast %cst_61 : f32 to vector<8x128xf32>
    %304 = arith.addf %303, %302 : vector<8x128xf32>
    %305 = arith.divf %303, %304 : vector<8x128xf32>
    %306 = math.tanh %300 : vector<8x128xf32>
    %307 = vector.extract_strided_slice %305 {offsets = [0, 0], sizes = [8, 32], strides = [1, 1]} : vector<8x128xf32> to vector<8x32xf32>
    %308 = vector.extract_strided_slice %305 {offsets = [0, 32], sizes = [8, 32], strides = [1, 1]} : vector<8x128xf32> to vector<8x32xf32>
    %309 = vector.extract_strided_slice %306 {offsets = [0, 64], sizes = [8, 32], strides = [1, 1]} : vector<8x128xf32> to vector<8x32xf32>
    %310 = vector.extract_strided_slice %305 {offsets = [0, 96], sizes = [8, 32], strides = [1, 1]} : vector<8x128xf32> to vector<8x32xf32>
    %311 = arith.mulf %308, %272 : vector<8x32xf32>
    %312 = arith.mulf %307, %309 : vector<8x32xf32>
    %313 = arith.addf %311, %312 : vector<8x32xf32>
    %314 = math.tanh %313 : vector<8x32xf32>
    %315 = arith.mulf %310, %314 : vector<8x32xf32>
    %316 = tpu.concatenate %315, %294 in 1 : vector<8x32xf32>, vector<8x32xf32> -> vector<8x64xf32>
    %cst_62 = arith.constant dense<0.000000e+00> : vector<8x256xf32>
    %317 = tpu.matmul %316, %0, %cst_62 {dimension_numbers = #tpu.dot_dimension_numbers<[1], [0], [0], [1], [0, 0, 1, 1], [], []>} : vector<8x64xf32>, vector<64x256xf32>, vector<8x256xf32> -> vector<8x256xf32>
    %318 = vector.extract_strided_slice %317 {offsets = [0, 128], sizes = [8, 128], strides = [1, 1]} : vector<8x256xf32> to vector<8x128xf32>
    %319 = arith.addf %318, %3 : vector<8x128xf32>
    %320 = arith.negf %319 : vector<8x128xf32>
    %321 = math.exp %320 : vector<8x128xf32>
    %cst_63 = arith.constant 1.000000e+00 : f32
    %322 = vector.broadcast %cst_63 : f32 to vector<8x128xf32>
    %323 = arith.addf %322, %321 : vector<8x128xf32>
    %324 = arith.divf %322, %323 : vector<8x128xf32>
    %325 = math.tanh %319 : vector<8x128xf32>
    %326 = vector.extract_strided_slice %324 {offsets = [0, 0], sizes = [8, 32], strides = [1, 1]} : vector<8x128xf32> to vector<8x32xf32>
    %327 = vector.extract_strided_slice %324 {offsets = [0, 32], sizes = [8, 32], strides = [1, 1]} : vector<8x128xf32> to vector<8x32xf32>
    %328 = vector.extract_strided_slice %325 {offsets = [0, 64], sizes = [8, 32], strides = [1, 1]} : vector<8x128xf32> to vector<8x32xf32>
    %329 = vector.extract_strided_slice %324 {offsets = [0, 96], sizes = [8, 32], strides = [1, 1]} : vector<8x128xf32> to vector<8x32xf32>
    %330 = arith.mulf %327, %292 : vector<8x32xf32>
    %331 = arith.mulf %326, %328 : vector<8x32xf32>
    %332 = arith.addf %330, %331 : vector<8x32xf32>
    %333 = math.tanh %332 : vector<8x32xf32>
    %334 = arith.mulf %329, %333 : vector<8x32xf32>
    %c224 = arith.constant 224 : index
    %c0_64 = arith.constant 0 : index
    %335 = vector.load %arg3[%c224, %c0_64] : memref<256x256xf32, #tpu.memory_space<vmem>>, vector<32x256xf32>
    %cst_65 = arith.constant dense<0.000000e+00> : vector<8x256xf32>
    %336 = tpu.matmul %334, %335, %cst_65 {dimension_numbers = #tpu.dot_dimension_numbers<[1], [0], [0], [1], [0, 0, 1, 1], [], []>} : vector<8x32xf32>, vector<32x256xf32>, vector<8x256xf32> -> vector<8x256xf32>
    %337 = arith.addf %297, %336 : vector<8x256xf32>
    %c0_66 = arith.constant 0 : index
    %c0_67 = arith.constant 0 : index
    %338 = vector.load %arg5[%c0_66, %c0_67] : memref<8x256xf32, #tpu.memory_space<vmem>>, vector<8x256xf32>
    tpu.vector_store %arg5[%c0_66, %c0_67], %337 {strides = array<i32>} : memref<8x256xf32, #tpu.memory_space<vmem>>, vector<8x256xf32>,
    return
  }
}

</mosaic_0001>

<llo_original>
// kernel: tpu_custom_call.1
$region0: #{tpu_custom_call.1}
  #allocation0 [shape = 'u32[]', space=smem, size = 0x4, offset = 0x4, fixed_abs, tag = 'smem constant byte address 0x4 - core index']
  #allocation1 [shape = 'u32[72,128]{1,0:T(1,128)}', space=vmem, size = 0x9000, scoped, tag = 'internal scratch']
  %s0 = inlined_call_operand.hbm [shape: f32[8,8,128], index: 0, kind: input, shape index: {}]
  %s1 = inlined_call_operand.hbm [shape: f32[64,256], index: 1, kind: input, shape index: {}]
  %s2 = inlined_call_operand.vmem [shape: f32[1,128], index: 2, kind: input, shape index: {}]
  %s3 = inlined_call_operand.hbm [shape: f32[256,256], index: 3, kind: input, shape index: {}]
  %s4 = inlined_call_operand.vmem [shape: f32[1,256], index: 4, kind: input, shape index: {}]
  %s5 = inlined_call_operand.hbm [shape: f32[8,256], index: 5, kind: output, shape index: {}]
  %s6 = sld [smem:[#allocation0]]
  $region42: #{tpu_custom_call.1} parent=0
    _
  %s8 = ssub.s32 1, %s6
  %s9 = scalar_select 0, %s8, %s6
  $region1: #{tpu_custom_call.1} parent=0
    #allocation2 [shape = 'u8[32768]{0}', space=vmem, size = 0x8000, scoped, tag = 'input window, operand 0, single buffered']
    #allocation3 [shape = 's32[1]{0}', space=sflag, size = 0x4, scoped, tag = 'scoped memory for tpu_custom_call.1']
    #allocation4 [shape = 's32[1]{0}', space=sflag, size = 0x4, scoped, tag = 'scoped memory for tpu_custom_call.1']
    #allocation5 [shape = 'u8[65536]{0}', space=vmem, size = 0x10000, scoped, tag = 'input window, operand 1, single buffered']
    #allocation6 [shape = 's32[1]{0}', space=sflag, size = 0x4, scoped, tag = 'scoped memory for tpu_custom_call.1']
    #allocation7 [shape = 'u8[262144]{0}', space=vmem, size = 0x40000, scoped, tag = 'input window, operand 3, single buffered']
    #allocation8 [shape = 'u8[8192]{0}', space=vmem, size = 0x2000, scoped, tag = 'output window, operand 0, single buffered']
    %10 = vsyncpa [#allocation3], 0
    %11 = vsyncpa [#allocation6], 0
    %12 = vsyncpa [#allocation4], 0
    // Predicated region
    $region2: #{tpu_custom_call.1} parent=1 // pred_check
      _
    $region3: #{tpu_custom_call.1} parent=1 // pred_check_branch
      %14 = sbr.rel (0) target = $region5
    $region4: #{tpu_custom_call.1} parent=1 // pred_region
      %16 = vsyncadd [#allocation3], 0
      %s17 = sshll.u32 %s0, 4
      %s18 = int_to_ptr.hbm [resolvable:$true] %s17
      %s19 = sshll.u32 [#allocation2], 4
      %s20 = int_to_ptr.vmem [resolvable:$true] %s19
      %25 = dma.hbm_to_vmem [thread:$0]  %s18, 1024, %s20, [#allocation3], 128, 128, 8
    $region5: #{tpu_custom_call.1} parent=1 // pred_fallthru
      _
    // Predicated region
    $region6: #{tpu_custom_call.1} parent=1 // pred_check
      _
    $region7: #{tpu_custom_call.1} parent=1 // pred_check_branch
      %27 = sbr.rel (0) target = $region9
    $region8: #{tpu_custom_call.1} parent=1 // pred_region
      %29 = vsyncadd [#allocation6], 0
      %s30 = sshll.u32 %s1, 4
      %s31 = int_to_ptr.hbm [resolvable:$true] %s30
      %s32 = sshll.u32 [#allocation5], 4
      %s33 = int_to_ptr.vmem [resolvable:$true] %s32
      %38 = dma.hbm_to_vmem [thread:$0]  %s31, 2048, %s33, [#allocation6], 256, 256, 16
    $region9: #{tpu_custom_call.1} parent=1 // pred_fallthru
      _
    // Predicated region
    $region10: #{tpu_custom_call.1} parent=1 // pred_check
      _
    $region11: #{tpu_custom_call.1} parent=1 // pred_check_branch
      %40 = sbr.rel (0) target = $region13
    $region12: #{tpu_custom_call.1} parent=1 // pred_region
      _
    $region13: #{tpu_custom_call.1} parent=1 // pred_fallthru
      _
    // Predicated region
    $region14: #{tpu_custom_call.1} parent=1 // pred_check
      _
    $region15: #{tpu_custom_call.1} parent=1 // pred_check_branch
      %42 = sbr.rel (0) target = $region17
    $region16: #{tpu_custom_call.1} parent=1 // pred_region
      %44 = vsyncadd [#allocation6], 0
      %s45 = sshll.u32 %s3, 4
      %s46 = int_to_ptr.hbm [resolvable:$true] %s45
      %s47 = sshll.u32 [#allocation7], 4
      %s48 = int_to_ptr.vmem [resolvable:$true] %s47
      %53 = dma.hbm_to_vmem [thread:$0]  %s46, 8192, %s48, [#allocation6], 256, 256, 16
    $region17: #{tpu_custom_call.1} parent=1 // pred_fallthru
      _
    // Predicated region
    $region18: #{tpu_custom_call.1} parent=1 // pred_check
      _
    $region19: #{tpu_custom_call.1} parent=1 // pred_check_branch
      %55 = sbr.rel (0) target = $region21
    $region20: #{tpu_custom_call.1} parent=1 // pred_region
      _
    $region21: #{tpu_custom_call.1} parent=1 // pred_fallthru
      _
    // Predicated region
    $region22: #{tpu_custom_call.1} parent=1 // pred_check
      _
    $region23: #{tpu_custom_call.1} parent=1 // pred_check_branch
      %57 = sbr.rel (0) target = $region25
    $region24: #{tpu_custom_call.1} parent=1 // pred_region
      %59 = dma.done [#allocation3], 1024
    $region25: #{tpu_custom_call.1} parent=1 // pred_fallthru
      _
    // Predicated region
    $region26: #{tpu_custom_call.1} parent=1 // pred_check
      _
    $region27: #{tpu_custom_call.1} parent=1 // pred_check_branch
      %61 = sbr.rel (0) target = $region29
    $region28: #{tpu_custom_call.1} parent=1 // pred_region
      %63 = dma.done [#allocation6], 2048
    $region29: #{tpu_custom_call.1} parent=1 // pred_fallthru
      _
    // Predicated region
    $region30: #{tpu_custom_call.1} parent=1 // pred_check
      _
    $region31: #{tpu_custom_call.1} parent=1 // pred_check_branch
      %65 = sbr.rel (0) target = $region33
    $region32: #{tpu_custom_call.1} parent=1 // pred_region
      %67 = dma.done [#allocation6], 8192
    $region33: #{tpu_custom_call.1} parent=1 // pred_fallthru
      _
    %v68 = vld [vmem:[#allocation5] sm:$0xff]
    %v69 = vld [vmem:[#allocation5 + $0x8] sm:$0xff]
    %v70 = vld [vmem:[#allocation5 + $0x10] sm:$0xff]
    %v71 = vld [vmem:[#allocation5 + $0x18] sm:$0xff]
    %v72 = vld [vmem:[#allocation5 + $0x20] sm:$0xff]
    %v73 = vld [vmem:[#allocation5 + $0x28] sm:$0xff]
    %v74 = vld [vmem:[#allocation5 + $0x30] sm:$0xff]
    %v75 = vld [vmem:[#allocation5 + $0x38] sm:$0xff]
    %v76 = vld [vmem:[#allocation5 + $0x40] sm:$0xff]
    %v77 = vld [vmem:[#allocation5 + $0x48] sm:$0xff]
    %v78 = vld [vmem:[#allocation5 + $0x50] sm:$0xff]
    %v79 = vld [vmem:[#allocation5 + $0x58] sm:$0xff]
    %v80 = vld [vmem:[#allocation5 + $0x60] sm:$0xff]
    %v81 = vld [vmem:[#allocation5 + $0x68] sm:$0xff]
    %v82 = vld [vmem:[#allocation5 + $0x70] sm:$0xff]
    %v83 = vld [vmem:[#allocation5 + $0x78] sm:$0xff]
    %v84 = vld [vmem:[%s2] sm:$0x1]
    %v86 = vperm.slane %v84, 0
    %v88 = vld [vmem:[%s4] sm:$0x3]
    %v90 = vperm.slane %v88, 0
    %v91 = vperm.slane %v88, 1
    %v94 = vld [vmem:[#allocation2] sm:$0xff]
    %v95 = vadd.f32 %v94, 0.0
    %v96 = vxor.u32 %v95, 2147483648
    %v97 = vmul.f32 %v96, 1.442695
    %v98 = vpow.pop %v97
    %v99 = vadd.f32 %v98, 1.0
    %v100 = vrcp.pop %v99
    %v101 = vmul.f32 %v99, %v100
    %v102 = vsub.f32 1.0, %v101
    %v103 = vmul.f32 %v100, %v102
    %v104 = vadd.f32 %v100, %v103
    %vm105 = vweird.f32 %v99
    %vm106 = vweird.f32 %v100
    %vm107 = vmor %vm105, %vm106
    %v108 = vsel %vm107, %v100, %v104
    %v109 = vand.u32 2147483647, %v99
    %vm110 = vcmp.eq.f32.partialorder %v109, 8.507059e+37
    %v111 = vand.u32 %v99, 2147483648
    %v112 = vor.u32 1.1754944e-38, %v111
    %v113 = vsel %vm110, %v112, %v108
    %v114 = vmul.f32 1.0, %v113
    %v115 = vtanh.pop %v95
    %v116 = vmul.f32 %v114, 0.0
    %118 = vrot.lane.b32.xlu0 %v115, 64
    %v119 = vpop.permute.xlu0 %118
    %v121 = vmul.f32 %v114, %v119
    %123 = vrot.lane.b32.xlu0 %v121, 32
    %v124 = vpop.permute.xlu0 %123
    %v126 = vadd.f32 %v116, %v124
    %v127 = vtanh.pop %v126
    %129 = vrot.lane.b32.xlu0 %v127, 64
    %v130 = vpop.permute.xlu0 %129
    %v132 = vmul.f32 %v114, %v130
    %134 = vrot.lane.b32.xlu0 %v132, 32
    %v135 = vpop.permute.xlu0 %134
    %vm137 = vcmask 261120
    %v138 = vsel %vm137, %v135, 0.0
    %vm139 = vcmask 523264
    %v141 = vsel %vm139, %v138, 0
    %143 = vmatpush.msra.mxu0 0.0
    %144 = vmatpush.msra.mxu0 0.0
    %145 = vmatpush.msra.mxu0 0.0
    %146 = vmatpush.msra.mxu0 0.0
    %147 = vmatpush.msra.mxu0 0.0
    %148 = vmatpush.msra.mxu0 0.0
    %149 = vmatpush.msra.mxu0 0.0
    %150 = vmatpush.msra.mxu0 0.0
    %151 = vmatpush.msra.mxu0 %v82
    %152 = vmatpush.msra.mxu0 %v80
    %153 = vmatpush.msra.mxu0 %v78
    %154 = vmatpush.msra.mxu0 %v76
    %155 = vmatpush.msra.mxu0 %v74
    %156 = vmatpush.msra.mxu0 %v72
    %157 = vmatpush.msra.mxu0 %v70
    %158 = vmatpush.msra.mxu0 %v68
    %159 = vmatmul.f32.gmra.mxu0 %v141
    %v160 = vpop.f32.mrf.mxu0
    %v161 = vadd.f32 0.0, %v160
    %162 = vdwg.mxu0
    %163 = vmatpush.msra.mxu0 0.0
    %164 = vmatpush.msra.mxu0 0.0
    %165 = vmatpush.msra.mxu0 0.0
    %166 = vmatpush.msra.mxu0 0.0
    %167 = vmatpush.msra.mxu0 0.0
    %168 = vmatpush.msra.mxu0 0.0
    %169 = vmatpush.msra.mxu0 0.0
    %170 = vmatpush.msra.mxu0 0.0
    %171 = vmatpush.msra.mxu0 %v83
    %172 = vmatpush.msra.mxu0 %v81
    %173 = vmatpush.msra.mxu0 %v79
    %174 = vmatpush.msra.mxu0 %v77
    %175 = vmatpush.msra.mxu0 %v75
    %176 = vmatpush.msra.mxu0 %v73
    %177 = vmatpush.msra.mxu0 %v71
    %178 = vmatpush.msra.mxu0 %v69
    %179 = vmatmul.f32.gmra.mxu0 %v141
    %v180 = vpop.f32.mrf.mxu0
    %v181 = vadd.f32 0.0, %v180
    %182 = vdwg.mxu0
    %v183 = vadd.f32 %v181, %v86
    %v184 = vxor.u32 %v183, 2147483648
    %v185 = vmul.f32 %v184, 1.442695
    %v186 = vpow.pop %v185
    %v187 = vadd.f32 %v186, 1.0
    %v188 = vrcp.pop %v187
    %v189 = vmul.f32 %v187, %v188
    %v190 = vsub.f32 1.0, %v189
    %v191 = vmul.f32 %v188, %v190
    %v192 = vadd.f32 %v188, %v191
    %vm193 = vweird.f32 %v187
    %vm194 = vweird.f32 %v188
    %vm195 = vmor %vm193, %vm194
    %v196 = vsel %vm195, %v188, %v192
    %v197 = vand.u32 2147483647, %v187
    %vm198 = vcmp.eq.f32.partialorder %v197, 8.507059e+37
    %v199 = vand.u32 %v187, 2147483648
    %v200 = vor.u32 1.1754944e-38, %v199
    %v201 = vsel %vm198, %v200, %v196
    %v202 = vmul.f32 1.0, %v201
    %v203 = vtanh.pop %v183
    %v204 = vmul.f32 %v202, 0.0
    %206 = vrot.lane.b32.xlu0 %v203, 64
    %v207 = vpop.permute.xlu0 %206
    %v209 = vmul.f32 %v202, %v207
    %211 = vrot.lane.b32.xlu0 %v209, 32
    %v212 = vpop.permute.xlu0 %211
    %v214 = vadd.f32 %v204, %v212
    %v215 = vtanh.pop %v214
    %217 = vrot.lane.b32.xlu0 %v215, 64
    %v218 = vpop.permute.xlu0 %217
    %v220 = vmul.f32 %v202, %v218
    %v221 = vld [vmem:[#allocation7] sm:$0xff]
    %v222 = vld [vmem:[#allocation7 + $0x8] sm:$0xff]
    %v223 = vld [vmem:[#allocation7 + $0x10] sm:$0xff]
    %v224 = vld [vmem:[#allocation7 + $0x18] sm:$0xff]
    %v225 = vld [vmem:[#allocation7 + $0x20] sm:$0xff]
    %v226 = vld [vmem:[#allocation7 + $0x28] sm:$0xff]
    %v227 = vld [vmem:[#allocation7 + $0x30] sm:$0xff]
    %v228 = vld [vmem:[#allocation7 + $0x38] sm:$0xff]
    %230 = vrot.lane.b32.xlu0 %v220, 32
    %v231 = vpop.permute.xlu0 %230
    %v232 = vsel %vm137, %v231, 0
    %234 = vmatpush.msra.mxu0 0.0
    %235 = vmatpush.msra.mxu0 0.0
    %236 = vmatpush.msra.mxu0 0.0
    %237 = vmatpush.msra.mxu0 0.0
    %238 = vmatpush.msra.mxu0 0.0
    %239 = vmatpush.msra.mxu0 0.0
    %240 = vmatpush.msra.mxu0 0.0
    %241 = vmatpush.msra.mxu0 0.0
    %242 = vmatpush.msra.mxu0 0.0
    %243 = vmatpush.msra.mxu0 0.0
    %244 = vmatpush.msra.mxu0 0.0
    %245 = vmatpush.msra.mxu0 0.0
    %246 = vmatpush.msra.mxu0 %v227
    %247 = vmatpush.msra.mxu0 %v225
    %248 = vmatpush.msra.mxu0 %v223
    %249 = vmatpush.msra.mxu0 %v221
    %250 = vmatmul.f32.gmra.mxu0 %v232
    %v251 = vpop.f32.mrf.mxu0
    %v252 = vadd.f32 0.0, %v251
    %253 = vdwg.mxu0
    %254 = vmatpush.msra.mxu0 0.0
    %255 = vmatpush.msra.mxu0 0.0
    %256 = vmatpush.msra.mxu0 0.0
    %257 = vmatpush.msra.mxu0 0.0
    %258 = vmatpush.msra.mxu0 0.0
    %259 = vmatpush.msra.mxu0 0.0
    %260 = vmatpush.msra.mxu0 0.0
    %261 = vmatpush.msra.mxu0 0.0
    %262 = vmatpush.msra.mxu0 0.0
    %263 = vmatpush.msra.mxu0 0.0
    %264 = vmatpush.msra.mxu0 0.0
    %265 = vmatpush.msra.mxu0 0.0
    %266 = vmatpush.msra.mxu0 %v228
    %267 = vmatpush.msra.mxu0 %v226
    %268 = vmatpush.msra.mxu0 %v224
    %269 = vmatpush.msra.mxu0 %v222
    %270 = vmatmul.f32.gmra.mxu0 %v232
    %v271 = vpop.f32.mrf.mxu0
    %v272 = vadd.f32 0.0, %v271
    %273 = vdwg.mxu0
    %v274 = vadd.f32 %v90, %v252
    %v275 = vadd.f32 %v91, %v272
    %s276 = scalar_lea.vmem [#allocation2], 8
    %v277 = vld [vmem:[%s276] sm:$0xff]
    %v278 = vadd.f32 %v277, %v161
    %v279 = vxor.u32 %v278, 2147483648
    %v280 = vmul.f32 %v279, 1.442695
    %v281 = vpow.pop %v280
    %v282 = vadd.f32 %v281, 1.0
    %v283 = vrcp.pop %v282
    %v284 = vmul.f32 %v282, %v283
    %v285 = vsub.f32 1.0, %v284
    %v286 = vmul.f32 %v283, %v285
    %v287 = vadd.f32 %v283, %v286
    %vm288 = vweird.f32 %v282
    %vm289 = vweird.f32 %v283
    %vm290 = vmor %vm288, %vm289
    %v291 = vsel %vm290, %v283, %v287
    %v292 = vand.u32 2147483647, %v282
    %vm293 = vcmp.eq.f32.partialorder %v292, 8.507059e+37
    %v294 = vand.u32 %v282, 2147483648
    %v295 = vor.u32 1.1754944e-38, %v294
    %v296 = vsel %vm293, %v295, %v291
    %v297 = vmul.f32 1.0, %v296
    %v298 = vtanh.pop %v278
    %v299 = vmul.f32 %v297, %v126
    %301 = vrot.lane.b32.xlu0 %v298, 64
    %v302 = vpop.permute.xlu0 %301
    %v304 = vmul.f32 %v297, %v302
    %306 = vrot.lane.b32.xlu0 %v304, 32
    %v307 = vpop.permute.xlu0 %306
    %v309 = vadd.f32 %v299, %v307
    %v310 = vtanh.pop %v309
    %312 = vrot.lane.b32.xlu0 %v310, 64
    %v313 = vpop.permute.xlu0 %312
    %v315 = vmul.f32 %v297, %v313
    %317 = vrot.lane.b32.xlu0 %v315, 32
    %v318 = vpop.permute.xlu0 %317
    %320 = vrot.lane.b32.xlu0 %v220, 64
    %v321 = vpop.permute.xlu0 %320
    %v323 = vsel %vm137, %v318, %v321
    %v325 = vsel %vm139, %v323, 0
    %327 = vmatpush.msra.mxu0 0.0
    %328 = vmatpush.msra.mxu0 0.0
    %329 = vmatpush.msra.mxu0 0.0
    %330 = vmatpush.msra.mxu0 0.0
    %331 = vmatpush.msra.mxu0 0.0
    %332 = vmatpush.msra.mxu0 0.0
    %333 = vmatpush.msra.mxu0 0.0
    %334 = vmatpush.msra.mxu0 0.0
    %335 = vmatpush.msra.mxu0 %v82
    %336 = vmatpush.msra.mxu0 %v80
    %337 = vmatpush.msra.mxu0 %v78
    %338 = vmatpush.msra.mxu0 %v76
    %339 = vmatpush.msra.mxu0 %v74
    %340 = vmatpush.msra.mxu0 %v72
    %341 = vmatpush.msra.mxu0 %v70
    %342 = vmatpush.msra.mxu0 %v68
    %343 = vmatmul.f32.gmra.mxu0 %v325
    %v344 = vpop.f32.mrf.mxu0
    %v345 = vadd.f32 0.0, %v344
    %346 = vdwg.mxu0
    %347 = vmatpush.msra.mxu0 0.0
    %348 = vmatpush.msra.mxu0 0.0
    %349 = vmatpush.msra.mxu0 0.0
    %350 = vmatpush.msra.mxu0 0.0
    %351 = vmatpush.msra.mxu0 0.0
    %352 = vmatpush.msra.mxu0 0.0
    %353 = vmatpush.msra.mxu0 0.0
    %354 = vmatpush.msra.mxu0 0.0
    %355 = vmatpush.msra.mxu0 %v83
    %356 = vmatpush.msra.mxu0 %v81
    %357 = vmatpush.msra.mxu0 %v79
    %358 = vmatpush.msra.mxu0 %v77
    %359 = vmatpush.msra.mxu0 %v75
    %360 = vmatpush.msra.mxu0 %v73
    %361 = vmatpush.msra.mxu0 %v71
    %362 = vmatpush.msra.mxu0 %v69
    %363 = vmatmul.f32.gmra.mxu0 %v325
    %v364 = vpop.f32.mrf.mxu0
    %v365 = vadd.f32 0.0, %v364
    %366 = vdwg.mxu0
    %v367 = vadd.f32 %v365, %v86
    %v368 = vxor.u32 %v367, 2147483648
    %v369 = vmul.f32 %v368, 1.442695
    %v370 = vpow.pop %v369
    %v371 = vadd.f32 %v370, 1.0
    %v372 = vrcp.pop %v371
    %v373 = vmul.f32 %v371, %v372
    %v374 = vsub.f32 1.0, %v373
    %v375 = vmul.f32 %v372, %v374
    %v376 = vadd.f32 %v372, %v375
    %vm377 = vweird.f32 %v371
    %vm378 = vweird.f32 %v372
    %vm379 = vmor %vm377, %vm378
    %v380 = vsel %vm379, %v372, %v376
    %v381 = vand.u32 2147483647, %v371
    %vm382 = vcmp.eq.f32.partialorder %v381, 8.507059e+37
    %v383 = vand.u32 %v371, 2147483648
    %v384 = vor.u32 1.1754944e-38, %v383
    %v385 = vsel %vm382, %v384, %v380
    %v386 = vmul.f32 1.0, %v385
    %v387 = vtanh.pop %v367
    %v388 = vmul.f32 %v386, %v214
    %390 = vrot.lane.b32.xlu0 %v387, 64
    %v391 = vpop.permute.xlu0 %390
    %v393 = vmul.f32 %v386, %v391
    %395 = vrot.lane.b32.xlu0 %v393, 32
    %v396 = vpop.permute.xlu0 %395
    %v398 = vadd.f32 %v388, %v396
    %v399 = vtanh.pop %v398
    %401 = vrot.lane.b32.xlu0 %v399, 64
    %v402 = vpop.permute.xlu0 %401
    %v404 = vmul.f32 %v386, %v402
    %v405 = vld [vmem:[#allocation7 + $0x40] sm:$0xff]
    %v406 = vld [vmem:[#allocation7 + $0x48] sm:$0xff]
    %v407 = vld [vmem:[#allocation7 + $0x50] sm:$0xff]
    %v408 = vld [vmem:[#allocation7 + $0x58] sm:$0xff]
    %v409 = vld [vmem:[#allocation7 + $0x60] sm:$0xff]
    %v410 = vld [vmem:[#allocation7 + $0x68] sm:$0xff]
    %v411 = vld [vmem:[#allocation7 + $0x70] sm:$0xff]
    %v412 = vld [vmem:[#allocation7 + $0x78] sm:$0xff]
    %414 = vrot.lane.b32.xlu0 %v404, 32
    %v415 = vpop.permute.xlu0 %414
    %v416 = vsel %vm137, %v415, 0
    %418 = vmatpush.msra.mxu0 0.0
    %419 = vmatpush.msra.mxu0 0.0
    %420 = vmatpush.msra.mxu0 0.0
    %421 = vmatpush.msra.mxu0 0.0
    %422 = vmatpush.msra.mxu0 0.0
    %423 = vmatpush.msra.mxu0 0.0
    %424 = vmatpush.msra.mxu0 0.0
    %425 = vmatpush.msra.mxu0 0.0
    %426 = vmatpush.msra.mxu0 0.0
    %427 = vmatpush.msra.mxu0 0.0
    %428 = vmatpush.msra.mxu0 0.0
    %429 = vmatpush.msra.mxu0 0.0
    %430 = vmatpush.msra.mxu0 %v411
    %431 = vmatpush.msra.mxu0 %v409
    %432 = vmatpush.msra.mxu0 %v407
    %433 = vmatpush.msra.mxu0 %v405
    %434 = vmatmul.f32.gmra.mxu0 %v416
    %v435 = vpop.f32.mrf.mxu0
    %v436 = vadd.f32 0.0, %v435
    %437 = vdwg.mxu0
    %438 = vmatpush.msra.mxu0 0.0
    %439 = vmatpush.msra.mxu0 0.0
    %440 = vmatpush.msra.mxu0 0.0
    %441 = vmatpush.msra.mxu0 0.0
    %442 = vmatpush.msra.mxu0 0.0
    %443 = vmatpush.msra.mxu0 0.0
    %444 = vmatpush.msra.mxu0 0.0
    %445 = vmatpush.msra.mxu0 0.0
    %446 = vmatpush.msra.mxu0 0.0
    %447 = vmatpush.msra.mxu0 0.0
    %448 = vmatpush.msra.mxu0 0.0
    %449 = vmatpush.msra.mxu0 0.0
    %450 = vmatpush.msra.mxu0 %v412
    %451 = vmatpush.msra.mxu0 %v410
    %452 = vmatpush.msra.mxu0 %v408
    %453 = vmatpush.msra.mxu0 %v406
    %454 = vmatmul.f32.gmra.mxu0 %v416
    %v455 = vpop.f32.mrf.mxu0
    %v456 = vadd.f32 0.0, %v455
    %457 = vdwg.mxu0
    %v458 = vadd.f32 %v274, %v436
    %v459 = vadd.f32 %v275, %v456
    %s460 = scalar_lea.vmem [#allocation2], 16
    %v461 = vld [vmem:[%s460] sm:$0xff]
    %v462 = vadd.f32 %v461, %v345
    %v463 = vxor.u32 %v462, 2147483648
    %v464 = vmul.f32 %v463, 1.442695
    %v465 = vpow.pop %v464
    %v466 = vadd.f32 %v465, 1.0
    %v467 = vrcp.pop %v466
    %v468 = vmul.f32 %v466, %v467
    %v469 = vsub.f32 1.0, %v468
    %v470 = vmul.f32 %v467, %v469
    %v471 = vadd.f32 %v467, %v470
    %vm472 = vweird.f32 %v466
    %vm473 = vweird.f32 %v467
    %vm474 = vmor %vm472, %vm473
    %v475 = vsel %vm474, %v467, %v471
    %v476 = vand.u32 2147483647, %v466
    %vm477 = vcmp.eq.f32.partialorder %v476, 8.507059e+37
    %v478 = vand.u32 %v466, 2147483648
    %v479 = vor.u32 1.1754944e-38, %v478
    %v480 = vsel %vm477, %v479, %v475
    %v481 = vmul.f32 1.0, %v480
    %v482 = vtanh.pop %v462
    %v483 = vmul.f32 %v481, %v309
    %485 = vrot.lane.b32.xlu0 %v482, 64
    %v486 = vpop.permute.xlu0 %485
    %v488 = vmul.f32 %v481, %v486
    %490 = vrot.lane.b32.xlu0 %v488, 32
    %v491 = vpop.permute.xlu0 %490
    %v493 = vadd.f32 %v483, %v491
    %v494 = vtanh.pop %v493
    %496 = vrot.lane.b32.xlu0 %v494, 64
    %v497 = vpop.permute.xlu0 %496
    %v499 = vmul.f32 %v481, %v497
    %501 = vrot.lane.b32.xlu0 %v499, 32
    %v502 = vpop.permute.xlu0 %501
    %504 = vrot.lane.b32.xlu0 %v404, 64
    %v505 = vpop.permute.xlu0 %504
    %v507 = vsel %vm137, %v502, %v505
    %v509 = vsel %vm139, %v507, 0
    %511 = vmatpush.msra.mxu0 0.0
    %512 = vmatpush.msra.mxu0 0.0
    %513 = vmatpush.msra.mxu0 0.0
    %514 = vmatpush.msra.mxu0 0.0
    %515 = vmatpush.msra.mxu0 0.0
    %516 = vmatpush.msra.mxu0 0.0
    %517 = vmatpush.msra.mxu0 0.0
    %518 = vmatpush.msra.mxu0 0.0
    %519 = vmatpush.msra.mxu0 %v82
    %520 = vmatpush.msra.mxu0 %v80
    %521 = vmatpush.msra.mxu0 %v78
    %522 = vmatpush.msra.mxu0 %v76
    %523 = vmatpush.msra.mxu0 %v74
    %524 = vmatpush.msra.mxu0 %v72
    %525 = vmatpush.msra.mxu0 %v70
    %526 = vmatpush.msra.mxu0 %v68
    %527 = vmatmul.f32.gmra.mxu0 %v509
    %v528 = vpop.f32.mrf.mxu0
    %v529 = vadd.f32 0.0, %v528
    %530 = vdwg.mxu0
    %531 = vmatpush.msra.mxu0 0.0
    %532 = vmatpush.msra.mxu0 0.0
    %533 = vmatpush.msra.mxu0 0.0
    %534 = vmatpush.msra.mxu0 0.0
    %535 = vmatpush.msra.mxu0 0.0
    %536 = vmatpush.msra.mxu0 0.0
    %537 = vmatpush.msra.mxu0 0.0
    %538 = vmatpush.msra.mxu0 0.0
    %539 = vmatpush.msra.mxu0 %v83
    %540 = vmatpush.msra.mxu0 %v81
    %541 = vmatpush.msra.mxu0 %v79
    %542 = vmatpush.msra.mxu0 %v77
    %543 = vmatpush.msra.mxu0 %v75
    %544 = vmatpush.msra.mxu0 %v73
    %545 = vmatpush.msra.mxu0 %v71
    %546 = vmatpush.msra.mxu0 %v69
    %547 = vmatmul.f32.gmra.mxu0 %v509
    %v548 = vpop.f32.mrf.mxu0
    %v549 = vadd.f32 0.0, %v548
    %550 = vdwg.mxu0
    %v551 = vadd.f32 %v549, %v86
    %v552 = vxor.u32 %v551, 2147483648
    %v553 = vmul.f32 %v552, 1.442695
    %v554 = vpow.pop %v553
    %v555 = vadd.f32 %v554, 1.0
    %v556 = vrcp.pop %v555
    %v557 = vmul.f32 %v555, %v556
    %v558 = vsub.f32 1.0, %v557
    %v559 = vmul.f32 %v556, %v558
    %v560 = vadd.f32 %v556, %v559
    %vm561 = vweird.f32 %v555
    %vm562 = vweird.f32 %v556
    %vm563 = vmor %vm561, %vm562
    %v564 = vsel %vm563, %v556, %v560
    %v565 = vand.u32 2147483647, %v555
    %vm566 = vcmp.eq.f32.partialorder %v565, 8.507059e+37
    %v567 = vand.u32 %v555, 2147483648
    %v568 = vor.u32 1.1754944e-38, %v567
    %v569 = vsel %vm566, %v568, %v564
    %v570 = vmul.f32 1.0, %v569
    %v571 = vtanh.pop %v551
    %v572 = vmul.f32 %v570, %v398
    %574 = vrot.lane.b32.xlu0 %v571, 64
    %v575 = vpop.permute.xlu0 %574
    %v577 = vmul.f32 %v570, %v575
    %579 = vrot.lane.b32.xlu0 %v577, 32
    %v580 = vpop.permute.xlu0 %579
    %v582 = vadd.f32 %v572, %v580
    %v583 = vtanh.pop %v582
    %585 = vrot.lane.b32.xlu0 %v583, 64
    %v586 = vpop.permute.xlu0 %585
    %v588 = vmul.f32 %v570, %v586
    %v589 = vld [vmem:[#allocation7 + $0x80] sm:$0xff]
    %v590 = vld [vmem:[#allocation7 + $0x88] sm:$0xff]
    %v591 = vld [vmem:[#allocation7 + $0x90] sm:$0xff]
    %v592 = vld [vmem:[#allocation7 + $0x98] sm:$0xff]
    %v593 = vld [vmem:[#allocation7 + $0xa0] sm:$0xff]
    %v594 = vld [vmem:[#allocation7 + $0xa8] sm:$0xff]
    %v595 = vld [vmem:[#allocation7 + $0xb0] sm:$0xff]
    %v596 = vld [vmem:[#allocation7 + $0xb8] sm:$0xff]
    %598 = vrot.lane.b32.xlu0 %v588, 32
    %v599 = vpop.permute.xlu0 %598
    %v600 = vsel %vm137, %v599, 0
    %602 = vmatpush.msra.mxu0 0.0
    %603 = vmatpush.msra.mxu0 0.0
    %604 = vmatpush.msra.mxu0 0.0
    %605 = vmatpush.msra.mxu0 0.0
    %606 = vmatpush.msra.mxu0 0.0
    %607 = vmatpush.msra.mxu0 0.0
    %608 = vmatpush.msra.mxu0 0.0
    %609 = vmatpush.msra.mxu0 0.0
    %610 = vmatpush.msra.mxu0 0.0
    %611 = vmatpush.msra.mxu0 0.0
    %612 = vmatpush.msra.mxu0 0.0
    %613 = vmatpush.msra.mxu0 0.0
    %614 = vmatpush.msra.mxu0 %v595
    %615 = vmatpush.msra.mxu0 %v593
    %616 = vmatpush.msra.mxu0 %v591
    %617 = vmatpush.msra.mxu0 %v589
    %618 = vmatmul.f32.gmra.mxu0 %v600
    %v619 = vpop.f32.mrf.mxu0
    %v620 = vadd.f32 0.0, %v619
    %621 = vdwg.mxu0
    %622 = vmatpush.msra.mxu0 0.0
    %623 = vmatpush.msra.mxu0 0.0
    %624 = vmatpush.msra.mxu0 0.0
    %625 = vmatpush.msra.mxu0 0.0
    %626 = vmatpush.msra.mxu0 0.0
    %627 = vmatpush.msra.mxu0 0.0
    %628 = vmatpush.msra.mxu0 0.0
    %629 = vmatpush.msra.mxu0 0.0
    %630 = vmatpush.msra.mxu0 0.0
    %631 = vmatpush.msra.mxu0 0.0
    %632 = vmatpush.msra.mxu0 0.0
    %633 = vmatpush.msra.mxu0 0.0
    %634 = vmatpush.msra.mxu0 %v596
    %635 = vmatpush.msra.mxu0 %v594
    %636 = vmatpush.msra.mxu0 %v592
    %637 = vmatpush.msra.mxu0 %v590
    %638 = vmatmul.f32.gmra.mxu0 %v600
    %v639 = vpop.f32.mrf.mxu0
    %v640 = vadd.f32 0.0, %v639
    %641 = vdwg.mxu0
    %v642 = vadd.f32 %v458, %v620
    %v643 = vadd.f32 %v459, %v640
    %s644 = scalar_lea.vmem [#allocation2], 24
    %v645 = vld [vmem:[%s644] sm:$0xff]
    %v646 = vadd.f32 %v645, %v529
    %v647 = vxor.u32 %v646, 2147483648
    %v648 = vmul.f32 %v647, 1.442695
    %v649 = vpow.pop %v648
    %v650 = vadd.f32 %v649, 1.0
    %v651 = vrcp.pop %v650
    %v652 = vmul.f32 %v650, %v651
    %v653 = vsub.f32 1.0, %v652
    %v654 = vmul.f32 %v651, %v653
    %v655 = vadd.f32 %v651, %v654
    %vm656 = vweird.f32 %v650
    %vm657 = vweird.f32 %v651
    %vm658 = vmor %vm656, %vm657
    %v659 = vsel %vm658, %v651, %v655
    %v660 = vand.u32 2147483647, %v650
    %vm661 = vcmp.eq.f32.partialorder %v660, 8.507059e+37
    %v662 = vand.u32 %v650, 2147483648
    %v663 = vor.u32 1.1754944e-38, %v662
    %v664 = vsel %vm661, %v663, %v659
    %v665 = vmul.f32 1.0, %v664
    %v666 = vtanh.pop %v646
    %v667 = vmul.f32 %v665, %v493
    %669 = vrot.lane.b32.xlu0 %v666, 64
    %v670 = vpop.permute.xlu0 %669
    %v672 = vmul.f32 %v665, %v670
    %674 = vrot.lane.b32.xlu0 %v672, 32
    %v675 = vpop.permute.xlu0 %674
    %v677 = vadd.f32 %v667, %v675
    %v678 = vtanh.pop %v677
    %680 = vrot.lane.b32.xlu0 %v678, 64
    %v681 = vpop.permute.xlu0 %680
    %v683 = vmul.f32 %v665, %v681
    %685 = vrot.lane.b32.xlu0 %v683, 32
    %v686 = vpop.permute.xlu0 %685
    %688 = vrot.lane.b32.xlu0 %v588, 64
    %v689 = vpop.permute.xlu0 %688
    %v691 = vsel %vm137, %v686, %v689
    %v693 = vsel %vm139, %v691, 0
    %695 = vmatpush.msra.mxu0 0.0
    %696 = vmatpush.msra.mxu0 0.0
    %697 = vmatpush.msra.mxu0 0.0
    %698 = vmatpush.msra.mxu0 0.0
    %699 = vmatpush.msra.mxu0 0.0
    %700 = vmatpush.msra.mxu0 0.0
    %701 = vmatpush.msra.mxu0 0.0
    %702 = vmatpush.msra.mxu0 0.0
    %703 = vmatpush.msra.mxu0 %v82
    %704 = vmatpush.msra.mxu0 %v80
    %705 = vmatpush.msra.mxu0 %v78
    %706 = vmatpush.msra.mxu0 %v76
    %707 = vmatpush.msra.mxu0 %v74
    %708 = vmatpush.msra.mxu0 %v72
    %709 = vmatpush.msra.mxu0 %v70
    %710 = vmatpush.msra.mxu0 %v68
    %711 = vmatmul.f32.gmra.mxu0 %v693
    %v712 = vpop.f32.mrf.mxu0
    %v713 = vadd.f32 0.0, %v712
    %714 = vdwg.mxu0
    %715 = vmatpush.msra.mxu0 0.0
    %716 = vmatpush.msra.mxu0 0.0
    %717 = vmatpush.msra.mxu0 0.0
    %718 = vmatpush.msra.mxu0 0.0
    %719 = vmatpush.msra.mxu0 0.0
    %720 = vmatpush.msra.mxu0 0.0
    %721 = vmatpush.msra.mxu0 0.0
    %722 = vmatpush.msra.mxu0 0.0
    %723 = vmatpush.msra.mxu0 %v83
    %724 = vmatpush.msra.mxu0 %v81
    %725 = vmatpush.msra.mxu0 %v79
    %726 = vmatpush.msra.mxu0 %v77
    %727 = vmatpush.msra.mxu0 %v75
    %728 = vmatpush.msra.mxu0 %v73
    %729 = vmatpush.msra.mxu0 %v71
    %730 = vmatpush.msra.mxu0 %v69
    %731 = vmatmul.f32.gmra.mxu0 %v693
    %v732 = vpop.f32.mrf.mxu0
    %v733 = vadd.f32 0.0, %v732
    %734 = vdwg.mxu0
    %v735 = vadd.f32 %v733, %v86
    %v736 = vxor.u32 %v735, 2147483648
    %v737 = vmul.f32 %v736, 1.442695
    %v738 = vpow.pop %v737
    %v739 = vadd.f32 %v738, 1.0
    %v740 = vrcp.pop %v739
    %v741 = vmul.f32 %v739, %v740
    %v742 = vsub.f32 1.0, %v741
    %v743 = vmul.f32 %v740, %v742
    %v744 = vadd.f32 %v740, %v743
    %vm745 = vweird.f32 %v739
    %vm746 = vweird.f32 %v740
    %vm747 = vmor %vm745, %vm746
    %v748 = vsel %vm747, %v740, %v744
    %v749 = vand.u32 2147483647, %v739
    %vm750 = vcmp.eq.f32.partialorder %v749, 8.507059e+37
    %v751 = vand.u32 %v739, 2147483648
    %v752 = vor.u32 1.1754944e-38, %v751
    %v753 = vsel %vm750, %v752, %v748
    %v754 = vmul.f32 1.0, %v753
    %v755 = vtanh.pop %v735
    %v756 = vmul.f32 %v754, %v582
    %758 = vrot.lane.b32.xlu0 %v755, 64
    %v759 = vpop.permute.xlu0 %758
    %v761 = vmul.f32 %v754, %v759
    %763 = vrot.lane.b32.xlu0 %v761, 32
    %v764 = vpop.permute.xlu0 %763
    %v766 = vadd.f32 %v756, %v764
    %v767 = vtanh.pop %v766
    %769 = vrot.lane.b32.xlu0 %v767, 64
    %v770 = vpop.permute.xlu0 %769
    %v772 = vmul.f32 %v754, %v770
    %v773 = vld [vmem:[#allocation7 + $0xc0] sm:$0xff]
    %v774 = vld [vmem:[#allocation7 + $0xc8] sm:$0xff]
    %v775 = vld [vmem:[#allocation7 + $0xd0] sm:$0xff]
    %v776 = vld [vmem:[#allocation7 + $0xd8] sm:$0xff]
    %v777 = vld [vmem:[#allocation7 + $0xe0] sm:$0xff]
    %v778 = vld [vmem:[#allocation7 + $0xe8] sm:$0xff]
    %v779 = vld [vmem:[#allocation7 + $0xf0] sm:$0xff]
    %v780 = vld [vmem:[#allocation7 + $0xf8] sm:$0xff]
    %782 = vrot.lane.b32.xlu0 %v772, 32
    %v783 = vpop.permute.xlu0 %782
    %v784 = vsel %vm137, %v783, 0
    %786 = vmatpush.msra.mxu0 0.0
    %787 = vmatpush.msra.mxu0 0.0
    %788 = vmatpush.msra.mxu0 0.0
    %789 = vmatpush.msra.mxu0 0.0
    %790 = vmatpush.msra.mxu0 0.0
    %791 = vmatpush.msra.mxu0 0.0
    %792 = vmatpush.msra.mxu0 0.0
    %793 = vmatpush.msra.mxu0 0.0
    %794 = vmatpush.msra.mxu0 0.0
    %795 = vmatpush.msra.mxu0 0.0
    %796 = vmatpush.msra.mxu0 0.0
    %797 = vmatpush.msra.mxu0 0.0
    %798 = vmatpush.msra.mxu0 %v779
    %799 = vmatpush.msra.mxu0 %v777
    %800 = vmatpush.msra.mxu0 %v775
    %801 = vmatpush.msra.mxu0 %v773
    %802 = vmatmul.f32.gmra.mxu0 %v784
    %v803 = vpop.f32.mrf.mxu0
    %v804 = vadd.f32 0.0, %v803
    %805 = vdwg.mxu0
    %806 = vmatpush.msra.mxu0 0.0
    %807 = vmatpush.msra.mxu0 0.0
    %808 = vmatpush.msra.mxu0 0.0
    %809 = vmatpush.msra.mxu0 0.0
    %810 = vmatpush.msra.mxu0 0.0
    %811 = vmatpush.msra.mxu0 0.0
    %812 = vmatpush.msra.mxu0 0.0
    %813 = vmatpush.msra.mxu0 0.0
    %814 = vmatpush.msra.mxu0 0.0
    %815 = vmatpush.msra.mxu0 0.0
    %816 = vmatpush.msra.mxu0 0.0
    %817 = vmatpush.msra.mxu0 0.0
    %818 = vmatpush.msra.mxu0 %v780
    %819 = vmatpush.msra.mxu0 %v778
    %820 = vmatpush.msra.mxu0 %v776
    %821 = vmatpush.msra.mxu0 %v774
    %822 = vmatmul.f32.gmra.mxu0 %v784
    %v823 = vpop.f32.mrf.mxu0
    %v824 = vadd.f32 0.0, %v823
    %825 = vdwg.mxu0
    %v826 = vadd.f32 %v642, %v804
    %v827 = vadd.f32 %v643, %v824
    %s828 = scalar_lea.vmem [#allocation2], 32
    %v829 = vld [vmem:[%s828] sm:$0xff]
    %v830 = vadd.f32 %v829, %v713
    %v831 = vxor.u32 %v830, 2147483648
    %v832 = vmul.f32 %v831, 1.442695
    %v833 = vpow.pop %v832
    %v834 = vadd.f32 %v833, 1.0
    %v835 = vrcp.pop %v834
    %v836 = vmul.f32 %v834, %v835
    %v837 = vsub.f32 1.0, %v836
    %v838 = vmul.f32 %v835, %v837
    %v839 = vadd.f32 %v835, %v838
    %vm840 = vweird.f32 %v834
    %vm841 = vweird.f32 %v835
    %vm842 = vmor %vm840, %vm841
    %v843 = vsel %vm842, %v835, %v839
    %v844 = vand.u32 2147483647, %v834
    %vm845 = vcmp.eq.f32.partialorder %v844, 8.507059e+37
    %v846 = vand.u32 %v834, 2147483648
    %v847 = vor.u32 1.1754944e-38, %v846
    %v848 = vsel %vm845, %v847, %v843
    %v849 = vmul.f32 1.0, %v848
    %v850 = vtanh.pop %v830
    %v851 = vmul.f32 %v849, %v677
    %853 = vrot.lane.b32.xlu0 %v850, 64
    %v854 = vpop.permute.xlu0 %853
    %v856 = vmul.f32 %v849, %v854
    %858 = vrot.lane.b32.xlu0 %v856, 32
    %v859 = vpop.permute.xlu0 %858
    %v861 = vadd.f32 %v851, %v859
    %v862 = vtanh.pop %v861
    %864 = vrot.lane.b32.xlu0 %v862, 64
    %v865 = vpop.permute.xlu0 %864
    %v867 = vmul.f32 %v849, %v865
    %869 = vrot.lane.b32.xlu0 %v867, 32
    %v870 = vpop.permute.xlu0 %869
    %872 = vrot.lane.b32.xlu0 %v772, 64
    %v873 = vpop.permute.xlu0 %872
    %v875 = vsel %vm137, %v870, %v873
    %v877 = vsel %vm139, %v875, 0
    %879 = vmatpush.msra.mxu0 0.0
    %880 = vmatpush.msra.mxu0 0.0
    %881 = vmatpush.msra.mxu0 0.0
    %882 = vmatpush.msra.mxu0 0.0
    %883 = vmatpush.msra.mxu0 0.0
    %884 = vmatpush.msra.mxu0 0.0
    %885 = vmatpush.msra.mxu0 0.0
    %886 = vmatpush.msra.mxu0 0.0
    %887 = vmatpush.msra.mxu0 %v82
    %888 = vmatpush.msra.mxu0 %v80
    %889 = vmatpush.msra.mxu0 %v78
    %890 = vmatpush.msra.mxu0 %v76
    %891 = vmatpush.msra.mxu0 %v74
    %892 = vmatpush.msra.mxu0 %v72
    %893 = vmatpush.msra.mxu0 %v70
    %894 = vmatpush.msra.mxu0 %v68
    %895 = vmatmul.f32.gmra.mxu0 %v877
    %v896 = vpop.f32.mrf.mxu0
    %v897 = vadd.f32 0.0, %v896
    %898 = vdwg.mxu0
    %899 = vmatpush.msra.mxu0 0.0
    %900 = vmatpush.msra.mxu0 0.0
    %901 = vmatpush.msra.mxu0 0.0
    %902 = vmatpush.msra.mxu0 0.0
    %903 = vmatpush.msra.mxu0 0.0
    %904 = vmatpush.msra.mxu0 0.0
    %905 = vmatpush.msra.mxu0 0.0
    %906 = vmatpush.msra.mxu0 0.0
    %907 = vmatpush.msra.mxu0 %v83
    %908 = vmatpush.msra.mxu0 %v81
    %909 = vmatpush.msra.mxu0 %v79
    %910 = vmatpush.msra.mxu0 %v77
    %911 = vmatpush.msra.mxu0 %v75
    %912 = vmatpush.msra.mxu0 %v73
    %913 = vmatpush.msra.mxu0 %v71
    %914 = vmatpush.msra.mxu0 %v69
    %915 = vmatmul.f32.gmra.mxu0 %v877
    %v916 = vpop.f32.mrf.mxu0
    %v917 = vadd.f32 0.0, %v916
    %918 = vdwg.mxu0
    %v919 = vadd.f32 %v917, %v86
    %v920 = vxor.u32 %v919, 2147483648
    %v921 = vmul.f32 %v920, 1.442695
    %v922 = vpow.pop %v921
    %v923 = vadd.f32 %v922, 1.0
    %v924 = vrcp.pop %v923
    %v925 = vmul.f32 %v923, %v924
    %v926 = vsub.f32 1.0, %v925
    %v927 = vmul.f32 %v924, %v926
    %v928 = vadd.f32 %v924, %v927
    %vm929 = vweird.f32 %v923
    %vm930 = vweird.f32 %v924
    %vm931 = vmor %vm929, %vm930
    %v932 = vsel %vm931, %v924, %v928
    %v933 = vand.u32 2147483647, %v923
    %vm934 = vcmp.eq.f32.partialorder %v933, 8.507059e+37
    %v935 = vand.u32 %v923, 2147483648
    %v936 = vor.u32 1.1754944e-38, %v935
    %v937 = vsel %vm934, %v936, %v932
    %v938 = vmul.f32 1.0, %v937
    %v939 = vtanh.pop %v919
    %v940 = vmul.f32 %v938, %v766
    %942 = vrot.lane.b32.xlu0 %v939, 64
    %v943 = vpop.permute.xlu0 %942
    %v945 = vmul.f32 %v938, %v943
    %947 = vrot.lane.b32.xlu0 %v945, 32
    %v948 = vpop.permute.xlu0 %947
    %v950 = vadd.f32 %v940, %v948
    %v951 = vtanh.pop %v950
    %953 = vrot.lane.b32.xlu0 %v951, 64
    %v954 = vpop.permute.xlu0 %953
    %v956 = vmul.f32 %v938, %v954
    %v957 = vld [vmem:[#allocation7 + $0x100] sm:$0xff]
    %v958 = vld [vmem:[#allocation7 + $0x108] sm:$0xff]
    %v959 = vld [vmem:[#allocation7 + $0x110] sm:$0xff]
    %v960 = vld [vmem:[#allocation7 + $0x118] sm:$0xff]
    %v961 = vld [vmem:[#allocation7 + $0x120] sm:$0xff]
    %v962 = vld [vmem:[#allocation7 + $0x128] sm:$0xff]
    %v963 = vld [vmem:[#allocation7 + $0x130] sm:$0xff]
    %v964 = vld [vmem:[#allocation7 + $0x138] sm:$0xff]
    %966 = vrot.lane.b32.xlu0 %v956, 32
    %v967 = vpop.permute.xlu0 %966
    %v968 = vsel %vm137, %v967, 0
    %970 = vmatpush.msra.mxu0 0.0
    %971 = vmatpush.msra.mxu0 0.0
    %972 = vmatpush.msra.mxu0 0.0
    %973 = vmatpush.msra.mxu0 0.0
    %974 = vmatpush.msra.mxu0 0.0
    %975 = vmatpush.msra.mxu0 0.0
    %976 = vmatpush.msra.mxu0 0.0
    %977 = vmatpush.msra.mxu0 0.0
    %978 = vmatpush.msra.mxu0 0.0
    %979 = vmatpush.msra.mxu0 0.0
    %980 = vmatpush.msra.mxu0 0.0
    %981 = vmatpush.msra.mxu0 0.0
    %982 = vmatpush.msra.mxu0 %v963
    %983 = vmatpush.msra.mxu0 %v961
    %984 = vmatpush.msra.mxu0 %v959
    %985 = vmatpush.msra.mxu0 %v957
    %986 = vmatmul.f32.gmra.mxu0 %v968
    %v987 = vpop.f32.mrf.mxu0
    %v988 = vadd.f32 0.0, %v987
    %989 = vdwg.mxu0
    %990 = vmatpush.msra.mxu0 0.0
    %991 = vmatpush.msra.mxu0 0.0
    %992 = vmatpush.msra.mxu0 0.0
    %993 = vmatpush.msra.mxu0 0.0
    %994 = vmatpush.msra.mxu0 0.0
    %995 = vmatpush.msra.mxu0 0.0
    %996 = vmatpush.msra.mxu0 0.0
    %997 = vmatpush.msra.mxu0 0.0
    %998 = vmatpush.msra.mxu0 0.0
    %999 = vmatpush.msra.mxu0 0.0
    %1000 = vmatpush.msra.mxu0 0.0
    %1001 = vmatpush.msra.mxu0 0.0
    %1002 = vmatpush.msra.mxu0 %v964
    %1003 = vmatpush.msra.mxu0 %v962
    %1004 = vmatpush.msra.mxu0 %v960
    %1005 = vmatpush.msra.mxu0 %v958
    %1006 = vmatmul.f32.gmra.mxu0 %v968
    %v1007 = vpop.f32.mrf.mxu0
    %v1008 = vadd.f32 0.0, %v1007
    %1009 = vdwg.mxu0
    %v1010 = vadd.f32 %v826, %v988
    %v1011 = vadd.f32 %v827, %v1008
    %s1012 = scalar_lea.vmem [#allocation2], 40
    %v1013 = vld [vmem:[%s1012] sm:$0xff]
    %v1014 = vadd.f32 %v1013, %v897
    %v1015 = vxor.u32 %v1014, 2147483648
    %v1016 = vmul.f32 %v1015, 1.442695
    %v1017 = vpow.pop %v1016
    %v1018 = vadd.f32 %v1017, 1.0
    %v1019 = vrcp.pop %v1018
    %v1020 = vmul.f32 %v1018, %v1019
    %v1021 = vsub.f32 1.0, %v1020
    %v1022 = vmul.f32 %v1019, %v1021
    %v1023 = vadd.f32 %v1019, %v1022
    %vm1024 = vweird.f32 %v1018
    %vm1025 = vweird.f32 %v1019
    %vm1026 = vmor %vm1024, %vm1025
    %v1027 = vsel %vm1026, %v1019, %v1023
    %v1028 = vand.u32 2147483647, %v1018
    %vm1029 = vcmp.eq.f32.partialorder %v1028, 8.507059e+37
    %v1030 = vand.u32 %v1018, 2147483648
    %v1031 = vor.u32 1.1754944e-38, %v1030
    %v1032 = vsel %vm1029, %v1031, %v1027
    %v1033 = vmul.f32 1.0, %v1032
    %v1034 = vtanh.pop %v1014
    %v1035 = vmul.f32 %v1033, %v861
    %1037 = vrot.lane.b32.xlu0 %v1034, 64
    %v1038 = vpop.permute.xlu0 %1037
    %v1040 = vmul.f32 %v1033, %v1038
    %1042 = vrot.lane.b32.xlu0 %v1040, 32
    %v1043 = vpop.permute.xlu0 %1042
    %v1045 = vadd.f32 %v1035, %v1043
    %v1046 = vtanh.pop %v1045
    %1048 = vrot.lane.b32.xlu0 %v1046, 64
    %v1049 = vpop.permute.xlu0 %1048
    %v1051 = vmul.f32 %v1033, %v1049
    %1053 = vrot.lane.b32.xlu0 %v1051, 32
    %v1054 = vpop.permute.xlu0 %1053
    %1056 = vrot.lane.b32.xlu0 %v956, 64
    %v1057 = vpop.permute.xlu0 %1056
    %v1059 = vsel %vm137, %v1054, %v1057
    %v1061 = vsel %vm139, %v1059, 0
    %1063 = vmatpush.msra.mxu0 0.0
    %1064 = vmatpush.msra.mxu0 0.0
    %1065 = vmatpush.msra.mxu0 0.0
    %1066 = vmatpush.msra.mxu0 0.0
    %1067 = vmatpush.msra.mxu0 0.0
    %1068 = vmatpush.msra.mxu0 0.0
    %1069 = vmatpush.msra.mxu0 0.0
    %1070 = vmatpush.msra.mxu0 0.0
    %1071 = vmatpush.msra.mxu0 %v82
    %1072 = vmatpush.msra.mxu0 %v80
    %1073 = vmatpush.msra.mxu0 %v78
    %1074 = vmatpush.msra.mxu0 %v76
    %1075 = vmatpush.msra.mxu0 %v74
    %1076 = vmatpush.msra.mxu0 %v72
    %1077 = vmatpush.msra.mxu0 %v70
    %1078 = vmatpush.msra.mxu0 %v68
    %1079 = vmatmul.f32.gmra.mxu0 %v1061
    %v1080 = vpop.f32.mrf.mxu0
    %v1081 = vadd.f32 0.0, %v1080
    %1082 = vdwg.mxu0
    %1083 = vmatpush.msra.mxu0 0.0
    %1084 = vmatpush.msra.mxu0 0.0
    %1085 = vmatpush.msra.mxu0 0.0
    %1086 = vmatpush.msra.mxu0 0.0
    %1087 = vmatpush.msra.mxu0 0.0
    %1088 = vmatpush.msra.mxu0 0.0
    %1089 = vmatpush.msra.mxu0 0.0
    %1090 = vmatpush.msra.mxu0 0.0
    %1091 = vmatpush.msra.mxu0 %v83
    %1092 = vmatpush.msra.mxu0 %v81
    %1093 = vmatpush.msra.mxu0 %v79
    %1094 = vmatpush.msra.mxu0 %v77
    %1095 = vmatpush.msra.mxu0 %v75
    %1096 = vmatpush.msra.mxu0 %v73
    %1097 = vmatpush.msra.mxu0 %v71
    %1098 = vmatpush.msra.mxu0 %v69
    %1099 = vmatmul.f32.gmra.mxu0 %v1061
    %v1100 = vpop.f32.mrf.mxu0
    %v1101 = vadd.f32 0.0, %v1100
    %1102 = vdwg.mxu0
    %v1103 = vadd.f32 %v1101, %v86
    %v1104 = vxor.u32 %v1103, 2147483648
    %v1105 = vmul.f32 %v1104, 1.442695
    %v1106 = vpow.pop %v1105
    %v1107 = vadd.f32 %v1106, 1.0
    %v1108 = vrcp.pop %v1107
    %v1109 = vmul.f32 %v1107, %v1108
    %v1110 = vsub.f32 1.0, %v1109
    %v1111 = vmul.f32 %v1108, %v1110
    %v1112 = vadd.f32 %v1108, %v1111
    %vm1113 = vweird.f32 %v1107
    %vm1114 = vweird.f32 %v1108
    %vm1115 = vmor %vm1113, %vm1114
    %v1116 = vsel %vm1115, %v1108, %v1112
    %v1117 = vand.u32 2147483647, %v1107
    %vm1118 = vcmp.eq.f32.partialorder %v1117, 8.507059e+37
    %v1119 = vand.u32 %v1107, 2147483648
    %v1120 = vor.u32 1.1754944e-38, %v1119
    %v1121 = vsel %vm1118, %v1120, %v1116
    %v1122 = vmul.f32 1.0, %v1121
    %v1123 = vtanh.pop %v1103
    %v1124 = vmul.f32 %v1122, %v950
    %1126 = vrot.lane.b32.xlu0 %v1123, 64
    %v1127 = vpop.permute.xlu0 %1126
    %v1129 = vmul.f32 %v1122, %v1127
    %1131 = vrot.lane.b32.xlu0 %v1129, 32
    %v1132 = vpop.permute.xlu0 %1131
    %v1134 = vadd.f32 %v1124, %v1132
    %v1135 = vtanh.pop %v1134
    %1137 = vrot.lane.b32.xlu0 %v1135, 64
    %v1138 = vpop.permute.xlu0 %1137
    %v1140 = vmul.f32 %v1122, %v1138
    %v1141 = vld [vmem:[#allocation7 + $0x140] sm:$0xff]
    %v1142 = vld [vmem:[#allocation7 + $0x148] sm:$0xff]
    %v1143 = vld [vmem:[#allocation7 + $0x150] sm:$0xff]
    %v1144 = vld [vmem:[#allocation7 + $0x158] sm:$0xff]
    %v1145 = vld [vmem:[#allocation7 + $0x160] sm:$0xff]
    %v1146 = vld [vmem:[#allocation7 + $0x168] sm:$0xff]
    %v1147 = vld [vmem:[#allocation7 + $0x170] sm:$0xff]
    %v1148 = vld [vmem:[#allocation7 + $0x178] sm:$0xff]
    %1150 = vrot.lane.b32.xlu0 %v1140, 32
    %v1151 = vpop.permute.xlu0 %1150
    %v1152 = vsel %vm137, %v1151, 0
    %1154 = vmatpush.msra.mxu0 0.0
    %1155 = vmatpush.msra.mxu0 0.0
    %1156 = vmatpush.msra.mxu0 0.0
    %1157 = vmatpush.msra.mxu0 0.0
    %1158 = vmatpush.msra.mxu0 0.0
    %1159 = vmatpush.msra.mxu0 0.0
    %1160 = vmatpush.msra.mxu0 0.0
    %1161 = vmatpush.msra.mxu0 0.0
    %1162 = vmatpush.msra.mxu0 0.0
    %1163 = vmatpush.msra.mxu0 0.0
    %1164 = vmatpush.msra.mxu0 0.0
    %1165 = vmatpush.msra.mxu0 0.0
    %1166 = vmatpush.msra.mxu0 %v1147
    %1167 = vmatpush.msra.mxu0 %v1145
    %1168 = vmatpush.msra.mxu0 %v1143
    %1169 = vmatpush.msra.mxu0 %v1141
    %1170 = vmatmul.f32.gmra.mxu0 %v1152
    %v1171 = vpop.f32.mrf.mxu0
    %v1172 = vadd.f32 0.0, %v1171
    %1173 = vdwg.mxu0
    %1174 = vmatpush.msra.mxu0 0.0
    %1175 = vmatpush.msra.mxu0 0.0
    %1176 = vmatpush.msra.mxu0 0.0
    %1177 = vmatpush.msra.mxu0 0.0
    %1178 = vmatpush.msra.mxu0 0.0
    %1179 = vmatpush.msra.mxu0 0.0
    %1180 = vmatpush.msra.mxu0 0.0
    %1181 = vmatpush.msra.mxu0 0.0
    %1182 = vmatpush.msra.mxu0 0.0
    %1183 = vmatpush.msra.mxu0 0.0
    %1184 = vmatpush.msra.mxu0 0.0
    %1185 = vmatpush.msra.mxu0 0.0
    %1186 = vmatpush.msra.mxu0 %v1148
    %1187 = vmatpush.msra.mxu0 %v1146
    %1188 = vmatpush.msra.mxu0 %v1144
    %1189 = vmatpush.msra.mxu0 %v1142
    %1190 = vmatmul.f32.gmra.mxu0 %v1152
    %v1191 = vpop.f32.mrf.mxu0
    %v1192 = vadd.f32 0.0, %v1191
    %1193 = vdwg.mxu0
    %v1194 = vadd.f32 %v1010, %v1172
    %v1195 = vadd.f32 %v1011, %v1192
    %s1196 = scalar_lea.vmem [#allocation2], 48
    %v1197 = vld [vmem:[%s1196] sm:$0xff]
    %v1198 = vadd.f32 %v1197, %v1081
    %v1199 = vxor.u32 %v1198, 2147483648
    %v1200 = vmul.f32 %v1199, 1.442695
    %v1201 = vpow.pop %v1200
    %v1202 = vadd.f32 %v1201, 1.0
    %v1203 = vrcp.pop %v1202
    %v1204 = vmul.f32 %v1202, %v1203
    %v1205 = vsub.f32 1.0, %v1204
    %v1206 = vmul.f32 %v1203, %v1205
    %v1207 = vadd.f32 %v1203, %v1206
    %vm1208 = vweird.f32 %v1202
    %vm1209 = vweird.f32 %v1203
    %vm1210 = vmor %vm1208, %vm1209
    %v1211 = vsel %vm1210, %v1203, %v1207
    %v1212 = vand.u32 2147483647, %v1202
    %vm1213 = vcmp.eq.f32.partialorder %v1212, 8.507059e+37
    %v1214 = vand.u32 %v1202, 2147483648
    %v1215 = vor.u32 1.1754944e-38, %v1214
    %v1216 = vsel %vm1213, %v1215, %v1211
    %v1217 = vmul.f32 1.0, %v1216
    %v1218 = vtanh.pop %v1198
    %v1219 = vmul.f32 %v1217, %v1045
    %1221 = vrot.lane.b32.xlu0 %v1218, 64
    %v1222 = vpop.permute.xlu0 %1221
    %v1224 = vmul.f32 %v1217, %v1222
    %1226 = vrot.lane.b32.xlu0 %v1224, 32
    %v1227 = vpop.permute.xlu0 %1226
    %v1229 = vadd.f32 %v1219, %v1227
    %v1230 = vtanh.pop %v1229
    %1232 = vrot.lane.b32.xlu0 %v1230, 64
    %v1233 = vpop.permute.xlu0 %1232
    %v1235 = vmul.f32 %v1217, %v1233
    %1237 = vrot.lane.b32.xlu0 %v1235, 32
    %v1238 = vpop.permute.xlu0 %1237
    %1240 = vrot.lane.b32.xlu0 %v1140, 64
    %v1241 = vpop.permute.xlu0 %1240
    %v1243 = vsel %vm137, %v1238, %v1241
    %v1245 = vsel %vm139, %v1243, 0
    %1247 = vmatpush.msra.mxu0 0.0
    %1248 = vmatpush.msra.mxu0 0.0
    %1249 = vmatpush.msra.mxu0 0.0
    %1250 = vmatpush.msra.mxu0 0.0
    %1251 = vmatpush.msra.mxu0 0.0
    %1252 = vmatpush.msra.mxu0 0.0
    %1253 = vmatpush.msra.mxu0 0.0
    %1254 = vmatpush.msra.mxu0 0.0
    %1255 = vmatpush.msra.mxu0 %v82
    %1256 = vmatpush.msra.mxu0 %v80
    %1257 = vmatpush.msra.mxu0 %v78
    %1258 = vmatpush.msra.mxu0 %v76
    %1259 = vmatpush.msra.mxu0 %v74
    %1260 = vmatpush.msra.mxu0 %v72
    %1261 = vmatpush.msra.mxu0 %v70
    %1262 = vmatpush.msra.mxu0 %v68
    %1263 = vmatmul.f32.gmra.mxu0 %v1245
    %v1264 = vpop.f32.mrf.mxu0
    %v1265 = vadd.f32 0.0, %v1264
    %1266 = vdwg.mxu0
    %1267 = vmatpush.msra.mxu0 0.0
    %1268 = vmatpush.msra.mxu0 0.0
    %1269 = vmatpush.msra.mxu0 0.0
    %1270 = vmatpush.msra.mxu0 0.0
    %1271 = vmatpush.msra.mxu0 0.0
    %1272 = vmatpush.msra.mxu0 0.0
    %1273 = vmatpush.msra.mxu0 0.0
    %1274 = vmatpush.msra.mxu0 0.0
    %1275 = vmatpush.msra.mxu0 %v83
    %1276 = vmatpush.msra.mxu0 %v81
    %1277 = vmatpush.msra.mxu0 %v79
    %1278 = vmatpush.msra.mxu0 %v77
    %1279 = vmatpush.msra.mxu0 %v75
    %1280 = vmatpush.msra.mxu0 %v73
    %1281 = vmatpush.msra.mxu0 %v71
    %1282 = vmatpush.msra.mxu0 %v69
    %1283 = vmatmul.f32.gmra.mxu0 %v1245
    %v1284 = vpop.f32.mrf.mxu0
    %v1285 = vadd.f32 0.0, %v1284
    %1286 = vdwg.mxu0
    %v1287 = vadd.f32 %v1285, %v86
    %v1288 = vxor.u32 %v1287, 2147483648
    %v1289 = vmul.f32 %v1288, 1.442695
    %v1290 = vpow.pop %v1289
    %v1291 = vadd.f32 %v1290, 1.0
    %v1292 = vrcp.pop %v1291
    %v1293 = vmul.f32 %v1291, %v1292
    %v1294 = vsub.f32 1.0, %v1293
    %v1295 = vmul.f32 %v1292, %v1294
    %v1296 = vadd.f32 %v1292, %v1295
    %vm1297 = vweird.f32 %v1291
    %vm1298 = vweird.f32 %v1292
    %vm1299 = vmor %vm1297, %vm1298
    %v1300 = vsel %vm1299, %v1292, %v1296
    %v1301 = vand.u32 2147483647, %v1291
    %vm1302 = vcmp.eq.f32.partialorder %v1301, 8.507059e+37
    %v1303 = vand.u32 %v1291, 2147483648
    %v1304 = vor.u32 1.1754944e-38, %v1303
    %v1305 = vsel %vm1302, %v1304, %v1300
    %v1306 = vmul.f32 1.0, %v1305
    %v1307 = vtanh.pop %v1287
    %v1308 = vmul.f32 %v1306, %v1134
    %1310 = vrot.lane.b32.xlu0 %v1307, 64
    %v1311 = vpop.permute.xlu0 %1310
    %v1313 = vmul.f32 %v1306, %v1311
    %1315 = vrot.lane.b32.xlu0 %v1313, 32
    %v1316 = vpop.permute.xlu0 %1315
    %v1318 = vadd.f32 %v1308, %v1316
    %v1319 = vtanh.pop %v1318
    %1321 = vrot.lane.b32.xlu0 %v1319, 64
    %v1322 = vpop.permute.xlu0 %1321
    %v1324 = vmul.f32 %v1306, %v1322
    %v1325 = vld [vmem:[#allocation7 + $0x180] sm:$0xff]
    %v1326 = vld [vmem:[#allocation7 + $0x188] sm:$0xff]
    %v1327 = vld [vmem:[#allocation7 + $0x190] sm:$0xff]
    %v1328 = vld [vmem:[#allocation7 + $0x198] sm:$0xff]
    %v1329 = vld [vmem:[#allocation7 + $0x1a0] sm:$0xff]
    %v1330 = vld [vmem:[#allocation7 + $0x1a8] sm:$0xff]
    %v1331 = vld [vmem:[#allocation7 + $0x1b0] sm:$0xff]
    %v1332 = vld [vmem:[#allocation7 + $0x1b8] sm:$0xff]
    %1334 = vrot.lane.b32.xlu0 %v1324, 32
    %v1335 = vpop.permute.xlu0 %1334
    %v1336 = vsel %vm137, %v1335, 0
    %1338 = vmatpush.msra.mxu0 0.0
    %1339 = vmatpush.msra.mxu0 0.0
    %1340 = vmatpush.msra.mxu0 0.0
    %1341 = vmatpush.msra.mxu0 0.0
    %1342 = vmatpush.msra.mxu0 0.0
    %1343 = vmatpush.msra.mxu0 0.0
    %1344 = vmatpush.msra.mxu0 0.0
    %1345 = vmatpush.msra.mxu0 0.0
    %1346 = vmatpush.msra.mxu0 0.0
    %1347 = vmatpush.msra.mxu0 0.0
    %1348 = vmatpush.msra.mxu0 0.0
    %1349 = vmatpush.msra.mxu0 0.0
    %1350 = vmatpush.msra.mxu0 %v1331
    %1351 = vmatpush.msra.mxu0 %v1329
    %1352 = vmatpush.msra.mxu0 %v1327
    %1353 = vmatpush.msra.mxu0 %v1325
    %1354 = vmatmul.f32.gmra.mxu0 %v1336
    %v1355 = vpop.f32.mrf.mxu0
    %v1356 = vadd.f32 0.0, %v1355
    %1357 = vdwg.mxu0
    %1358 = vmatpush.msra.mxu0 0.0
    %1359 = vmatpush.msra.mxu0 0.0
    %1360 = vmatpush.msra.mxu0 0.0
    %1361 = vmatpush.msra.mxu0 0.0
    %1362 = vmatpush.msra.mxu0 0.0
    %1363 = vmatpush.msra.mxu0 0.0
    %1364 = vmatpush.msra.mxu0 0.0
    %1365 = vmatpush.msra.mxu0 0.0
    %1366 = vmatpush.msra.mxu0 0.0
    %1367 = vmatpush.msra.mxu0 0.0
    %1368 = vmatpush.msra.mxu0 0.0
    %1369 = vmatpush.msra.mxu0 0.0
    %1370 = vmatpush.msra.mxu0 %v1332
    %1371 = vmatpush.msra.mxu0 %v1330
    %1372 = vmatpush.msra.mxu0 %v1328
    %1373 = vmatpush.msra.mxu0 %v1326
    %1374 = vmatmul.f32.gmra.mxu0 %v1336
    %v1375 = vpop.f32.mrf.mxu0
    %v1376 = vadd.f32 0.0, %v1375
    %1377 = vdwg.mxu0
    %v1378 = vadd.f32 %v1194, %v1356
    %v1379 = vadd.f32 %v1195, %v1376
    %s1380 = scalar_lea.vmem [#allocation2], 56
    %v1381 = vld [vmem:[%s1380] sm:$0xff]
    %v1382 = vadd.f32 %v1381, %v1265
    %v1383 = vxor.u32 %v1382, 2147483648
    %v1384 = vmul.f32 %v1383, 1.442695
    %v1385 = vpow.pop %v1384
    %v1386 = vadd.f32 %v1385, 1.0
    %v1387 = vrcp.pop %v1386
    %v1388 = vmul.f32 %v1386, %v1387
    %v1389 = vsub.f32 1.0, %v1388
    %v1390 = vmul.f32 %v1387, %v1389
    %v1391 = vadd.f32 %v1387, %v1390
    %vm1392 = vweird.f32 %v1386
    %vm1393 = vweird.f32 %v1387
    %vm1394 = vmor %vm1392, %vm1393
    %v1395 = vsel %vm1394, %v1387, %v1391
    %v1396 = vand.u32 2147483647, %v1386
    %vm1397 = vcmp.eq.f32.partialorder %v1396, 8.507059e+37
    %v1398 = vand.u32 %v1386, 2147483648
    %v1399 = vor.u32 1.1754944e-38, %v1398
    %v1400 = vsel %vm1397, %v1399, %v1395
    %v1401 = vmul.f32 1.0, %v1400
    %v1402 = vtanh.pop %v1382
    %v1403 = vmul.f32 %v1401, %v1229
    %1405 = vrot.lane.b32.xlu0 %v1402, 64
    %v1406 = vpop.permute.xlu0 %1405
    %v1408 = vmul.f32 %v1401, %v1406
    %1410 = vrot.lane.b32.xlu0 %v1408, 32
    %v1411 = vpop.permute.xlu0 %1410
    %v1413 = vadd.f32 %v1403, %v1411
    %v1414 = vtanh.pop %v1413
    %1416 = vrot.lane.b32.xlu0 %v1414, 64
    %v1417 = vpop.permute.xlu0 %1416
    %v1419 = vmul.f32 %v1401, %v1417
    %1421 = vrot.lane.b32.xlu0 %v1419, 32
    %v1422 = vpop.permute.xlu0 %1421
    %1424 = vrot.lane.b32.xlu0 %v1324, 64
    %v1425 = vpop.permute.xlu0 %1424
    %v1427 = vsel %vm137, %v1422, %v1425
    %v1429 = vsel %vm139, %v1427, 0
    %1431 = vmatpush.msra.mxu0 0.0
    %1432 = vmatpush.msra.mxu0 0.0
    %1433 = vmatpush.msra.mxu0 0.0
    %1434 = vmatpush.msra.mxu0 0.0
    %1435 = vmatpush.msra.mxu0 0.0
    %1436 = vmatpush.msra.mxu0 0.0
    %1437 = vmatpush.msra.mxu0 0.0
    %1438 = vmatpush.msra.mxu0 0.0
    %1439 = vmatpush.msra.mxu0 %v83
    %1440 = vmatpush.msra.mxu0 %v81
    %1441 = vmatpush.msra.mxu0 %v79
    %1442 = vmatpush.msra.mxu0 %v77
    %1443 = vmatpush.msra.mxu0 %v75
    %1444 = vmatpush.msra.mxu0 %v73
    %1445 = vmatpush.msra.mxu0 %v71
    %1446 = vmatpush.msra.mxu0 %v69
    %1447 = vmatmul.f32.gmra.mxu0 %v1429
    %v1448 = vpop.f32.mrf.mxu0
    %v1449 = vadd.f32 0.0, %v1448
    %1450 = vdwg.mxu0
    %v1451 = vadd.f32 %v1449, %v86
    %v1452 = vxor.u32 %v1451, 2147483648
    %v1453 = vmul.f32 %v1452, 1.442695
    %v1454 = vpow.pop %v1453
    %v1455 = vadd.f32 %v1454, 1.0
    %v1456 = vrcp.pop %v1455
    %v1457 = vmul.f32 %v1455, %v1456
    %v1458 = vsub.f32 1.0, %v1457
    %v1459 = vmul.f32 %v1456, %v1458
    %v1460 = vadd.f32 %v1456, %v1459
    %vm1461 = vweird.f32 %v1455
    %vm1462 = vweird.f32 %v1456
    %vm1463 = vmor %vm1461, %vm1462
    %v1464 = vsel %vm1463, %v1456, %v1460
    %v1465 = vand.u32 2147483647, %v1455
    %vm1466 = vcmp.eq.f32.partialorder %v1465, 8.507059e+37
    %v1467 = vand.u32 %v1455, 2147483648
    %v1468 = vor.u32 1.1754944e-38, %v1467
    %v1469 = vsel %vm1466, %v1468, %v1464
    %v1470 = vmul.f32 1.0, %v1469
    %v1471 = vtanh.pop %v1451
    %v1472 = vmul.f32 %v1470, %v1318
    %1474 = vrot.lane.b32.xlu0 %v1471, 64
    %v1475 = vpop.permute.xlu0 %1474
    %v1477 = vmul.f32 %v1470, %v1475
    %1479 = vrot.lane.b32.xlu0 %v1477, 32
    %v1480 = vpop.permute.xlu0 %1479
    %v1482 = vadd.f32 %v1472, %v1480
    %v1483 = vtanh.pop %v1482
    %1485 = vrot.lane.b32.xlu0 %v1483, 64
    %v1486 = vpop.permute.xlu0 %1485
    %v1488 = vmul.f32 %v1470, %v1486
    %v1489 = vld [vmem:[#allocation7 + $0x1c0] sm:$0xff]
    %v1490 = vld [vmem:[#allocation7 + $0x1c8] sm:$0xff]
    %v1491 = vld [vmem:[#allocation7 + $0x1d0] sm:$0xff]
    %v1492 = vld [vmem:[#allocation7 + $0x1d8] sm:$0xff]
    %v1493 = vld [vmem:[#allocation7 + $0x1e0] sm:$0xff]
    %v1494 = vld [vmem:[#allocation7 + $0x1e8] sm:$0xff]
    %v1495 = vld [vmem:[#allocation7 + $0x1f0] sm:$0xff]
    %v1496 = vld [vmem:[#allocation7 + $0x1f8] sm:$0xff]
    %1498 = vrot.lane.b32.xlu0 %v1488, 32
    %v1499 = vpop.permute.xlu0 %1498
    %v1500 = vsel %vm137, %v1499, 0
    %1502 = vmatpush.msra.mxu0 0.0
    %1503 = vmatpush.msra.mxu0 0.0
    %1504 = vmatpush.msra.mxu0 0.0
    %1505 = vmatpush.msra.mxu0 0.0
    %1506 = vmatpush.msra.mxu0 0.0
    %1507 = vmatpush.msra.mxu0 0.0
    %1508 = vmatpush.msra.mxu0 0.0
    %1509 = vmatpush.msra.mxu0 0.0
    %1510 = vmatpush.msra.mxu0 0.0
    %1511 = vmatpush.msra.mxu0 0.0
    %1512 = vmatpush.msra.mxu0 0.0
    %1513 = vmatpush.msra.mxu0 0.0
    %1514 = vmatpush.msra.mxu0 %v1495
    %1515 = vmatpush.msra.mxu0 %v1493
    %1516 = vmatpush.msra.mxu0 %v1491
    %1517 = vmatpush.msra.mxu0 %v1489
    %1518 = vmatmul.f32.gmra.mxu0 %v1500
    %v1519 = vpop.f32.mrf.mxu0
    %v1520 = vadd.f32 0.0, %v1519
    %1521 = vdwg.mxu0
    %1522 = vmatpush.msra.mxu0 0.0
    %1523 = vmatpush.msra.mxu0 0.0
    %1524 = vmatpush.msra.mxu0 0.0
    %1525 = vmatpush.msra.mxu0 0.0
    %1526 = vmatpush.msra.mxu0 0.0
    %1527 = vmatpush.msra.mxu0 0.0
    %1528 = vmatpush.msra.mxu0 0.0
    %1529 = vmatpush.msra.mxu0 0.0
    %1530 = vmatpush.msra.mxu0 0.0
    %1531 = vmatpush.msra.mxu0 0.0
    %1532 = vmatpush.msra.mxu0 0.0
    %1533 = vmatpush.msra.mxu0 0.0
    %1534 = vmatpush.msra.mxu0 %v1496
    %1535 = vmatpush.msra.mxu0 %v1494
    %1536 = vmatpush.msra.mxu0 %v1492
    %1537 = vmatpush.msra.mxu0 %v1490
    %1538 = vmatmul.f32.gmra.mxu0 %v1500
    %v1539 = vpop.f32.mrf.mxu0
    %v1540 = vadd.f32 0.0, %v1539
    %1541 = vdwg.mxu0
    %v1542 = vadd.f32 %v1378, %v1520
    %v1543 = vadd.f32 %v1379, %v1540
    %1544 = vst [vmem:[#allocation8] sm:$0xff] %v1542
    %1545 = vst [vmem:[#allocation8 + $0x8] sm:$0xff] %v1543
    // Predicated region
    $region34: #{tpu_custom_call.1} parent=1 // pred_check
      _
    $region35: #{tpu_custom_call.1} parent=1 // pred_check_branch
      %1547 = sbr.rel (0) target = $region37
    $region36: #{tpu_custom_call.1} parent=1 // pred_region
      %1549 = vsyncadd [#allocation4], 0
      %s1551 = sshll.u32 [#allocation8], 4
      %s1552 = int_to_ptr.vmem [resolvable:$true] %s1551
      %s1553 = sshll.u32 %s5, 4
      %s1554 = int_to_ptr.hbm [resolvable:$true] %s1553
      %1556 = dma.vmem_to_hbm [thread:$0]  %s1552, 256, %s1554, [#allocation4]
    $region37: #{tpu_custom_call.1} parent=1 // pred_fallthru
      _
    // Predicated region
    $region38: #{tpu_custom_call.1} parent=1 // pred_check
      _
    $region39: #{tpu_custom_call.1} parent=1 // pred_check_branch
      %1558 = sbr.rel (0) target = $region41
    $region40: #{tpu_custom_call.1} parent=1 // pred_region
      %1560 = dma.done [#allocation4], 256
    $region41: #{tpu_custom_call.1} parent=1 // pred_fallthru
      _
    %1561 = vsyncpa [#allocation3], 1
    %1562 = vsyncpa [#allocation6], 1
    %1563 = vsyncpa [#allocation4], 1

</llo_original>
